<compile_context>
chip_gen: v7x
topology: tpu7x:2x2x1
jax: 0.10.0
libtpu: 0.0.40
codegen_flags: <defaults>
</compile_context>

<pallas_src>
import functools

import jax
import jax.numpy as jnp
from jax.experimental import pallas as pl
from jax.experimental.pallas import tpu as pltpu

EPS = 1e-5  # PyTorch InstanceNorm2d default eps


def _device_kind():
    try:
        devs = jax.devices()
        return devs[0].device_kind.lower() if devs else ""
    except Exception:
        return ""


def residual_block_kernel(x_ref, w1_ref, w2_ref, o_ref, *, H, W, tap_dtype):
    x = x_ref[0].astype(jnp.float32)          # (Cp, N) flat image
    C, N = x.shape
    inv_n = 1.0 / N

    # Reflection-boundary masks on the flat spatial axis (computed once,
    # shared by both convs; (1, N), broadcast inside the selects).
    pos = jax.lax.broadcasted_iota(jnp.int32, (1, N), 1)
    col = pos % W
    row0 = pos < W                            # first image row
    rowL = pos >= (H - 1) * W                 # last image row
    col0 = col == 0                           # first image column
    colL = col == W - 1                       # last image column

    def conv3x3(a, w_ref):
        # a: (Cp, N);  w_ref: (9, Cp, Cp) bf16, tap-major (t = ky*3 + kx).
        # Build each reflection-padded shifted tap with XLU rolls plus edge
        # fixes and immediately feed it to one MXU matmul, accumulating the
        # 9 partial products in f32 -- no im2col buffer is ever materialized.
        a = a.astype(tap_dtype)
        up = pltpu.roll(a, shift=W, axis=1)         # value of row i-1
        down = pltpu.roll(a, shift=N - W, axis=1)   # value of row i+1
        rows = (
            jnp.where(row0, down, up),   # ky = 0  (reflect at top edge)
            a,                           # ky = 1
            jnp.where(rowL, up, down),   # ky = 2  (reflect at bottom edge)
        )
        acc = None
        t = 0
        for r in rows:
            left = pltpu.roll(r, shift=1, axis=1)       # value of col j-1
            right = pltpu.roll(r, shift=N - 1, axis=1)  # value of col j+1
            cols = (
                jnp.where(col0, right, left),   # kx = 0 (reflect left)
                r,                              # kx = 1
                jnp.where(colL, left, right),   # kx = 2 (reflect right)
            )
            for tap in cols:
                p = jnp.dot(w_ref[t], tap.astype(jnp.bfloat16),
                            preferred_element_type=jnp.float32)
                acc = p if acc is None else acc + p
                t += 1
        return acc                                # (Cp, N) f32

    def inorm(a):
        # Fused statistics: one sweep computes sum and sum-of-squares.
        s = jnp.sum(a, axis=1, keepdims=True)
        s2 = jnp.sum(a * a, axis=1, keepdims=True)
        mean = s * inv_n
        var = jnp.maximum(s2 * inv_n - mean * mean, 0.0)
        return (a - mean) * jax.lax.rsqrt(var + EPS)

    y = conv3x3(x, w1_ref)                     # (Cp, N) f32
    y = jnp.maximum(inorm(y), 0.0)             # InstanceNorm + ReLU
    y = conv3x3(y, w2_ref)
    y = inorm(y)

    o_ref[0] = (x + y).astype(o_ref.dtype)     # residual add


def residual_block(x, w1, b1, w2, b2):
    """x: (B, C, H, W); w*: (C, C, 3, 3); b*: (C,). Returns (B, C, H, W)."""
    # Biases are accepted for API parity with nn.Conv2d but never applied:
    # InstanceNorm2d(affine=False) right after each conv removes any
    # per-channel constant shift, so conv(x)+b and conv(x) normalize equally.
    del b1, b2

    B, C, H, W = x.shape
    N = H * W
    Cp = max(8, ((C + 7) // 8) * 8)            # pad channels to sublane multiple

    kind = _device_kind()
    # bf16 tap construction only where the VPU handles bf16 natively.
    tap_dtype = jnp.bfloat16 if ("v6" in kind or "v7" in kind) else jnp.float32
    # v5e/v6e: 128 MiB physical VMEM; v7x (and unknown): stay well under 64 MiB.
    vmem_limit = (100 << 20) if ("v5" in kind or "v6" in kind) else (48 << 20)

    def prep_w(w):
        wp = jnp.zeros((Cp, Cp, 3, 3), w.dtype).at[:C, :C].set(w)
        # (Cout, Cin, ky, kx) -> (ky, kx, Cout, Cin) -> (9, Cout, Cin) bf16,
        # matching the kernel's tap order t = ky*3 + kx.
        return wp.transpose(2, 3, 0, 1).reshape(9, Cp, Cp).astype(jnp.bfloat16)

    w1p, w2p = prep_w(w1), prep_w(w2)

    x_flat = x.reshape(B, C, N)
    if Cp != C:
        x_flat = jnp.pad(x_flat, ((0, 0), (0, Cp - C), (0, 0)))

    # TODO(synk): for very large C*H*W (or B == 1 on v7x's two TensorCores)
    # add a spatial-band grid axis with a 1-row halo and a two-pass instance
    # norm so per-step VMEM stays bounded and both cores get work.
    out = pl.pallas_call(
        functools.partial(residual_block_kernel, H=H, W=W, tap_dtype=tap_dtype),
        out_shape=jax.ShapeDtypeStruct((B, Cp, N), x.dtype),
        grid_spec=pltpu.PrefetchScalarGridSpec(
            num_scalar_prefetch=0,
            grid=(B,),
            in_specs=[
                pl.BlockSpec((1, Cp, N), lambda b: (b, 0, 0)),
                pl.BlockSpec((9, Cp, Cp), lambda b: (0, 0, 0)),
                pl.BlockSpec((9, Cp, Cp), lambda b: (0, 0, 0)),
            ],
            out_specs=pl.BlockSpec((1, Cp, N), lambda b: (b, 0, 0)),
        ),
        compiler_params=pltpu.CompilerParams(
            dimension_semantics=("parallel",),
            vmem_limit_bytes=vmem_limit,
        ),
    )(x_flat, w1p, w2p)

    if Cp != C:
        out = out[:, :C, :]
    return out.reshape(B, C, H, W)


def reference_residual_block(x, w1, b1, w2, b2):
    # Pure-JAX f32 reference (matches the PyTorch module semantics).
    def conv(a, w, b):
        ap = jnp.pad(a, ((0, 0), (0, 0), (1, 1), (1, 1)), mode="reflect")
        y = jax.lax.conv_general_dilated(
            ap, w, window_strides=(1, 1), padding="VALID",
            dimension_numbers=("NCHW", "OIHW", "NCHW"),
            precision=jax.lax.Precision.HIGHEST)
        return y + b[None, :, None, None]

    def inorm(a):
        mean = jnp.mean(a, axis=(2, 3), keepdims=True)
        var = jnp.mean((a - mean) ** 2, axis=(2, 3), keepdims=True)
        return (a - mean) * jax.lax.rsqrt(var + EPS)

    y = jnp.maximum(inorm(conv(x, w1, b1)), 0.0)
    y = inorm(conv(y, w2, b2))
    return x + y


if __name__ == "__main__":
    B, C, H, W = 2, 4, 16, 16
    key = jax.random.PRNGKey(0)
    kx, kw1, kb1, kw2, kb2 = jax.random.split(key, 5)

    x = jax.random.normal(kx, (B, C, H, W), jnp.float32)
    # Synthetic Conv2d parameters: weight (C, C, 3, 3), bias (C,).
    fan_in = C * 3 * 3
    bound = 1.0 / (fan_in ** 0.5)
    w1 = jax.random.uniform(kw1, (C, C, 3, 3), jnp.float32, -bound, bound)
    b1 = jax.random.uniform(kb1, (C,), jnp.float32, -bound, bound)
    w2 = jax.random.uniform(kw2, (C, C, 3, 3), jnp.float32, -bound, bound)
    b2 = jax.random.uniform(kb2, (C,), jnp.float32, -bound, bound)

    out = residual_block(x, w1, b1, w2, b2)
    jax.block_until_ready(out)

    ref = reference_residual_block(x, w1, b1, w2, b2)
    assert out.shape == (B, C, H, W)
    # bf16 MXU operands with f32 accumulation -> slightly looser tolerance
    # than a pure-f32 comparison.
    max_err = float(jnp.max(jnp.abs(out - ref)))
    assert jnp.allclose(out, ref, rtol=2e-2, atol=2e-2), max_err

    print("KERNEL_OK")
</pallas_src>

<mosaic_0001>
module attributes {stable_mosaic.version = 11 : i64} {
  func.func @residual_block_kernel(%arg0: i32, %arg1: memref<1x8x256xf32, #tpu.memory_space<vmem>>, %arg2: memref<9x8x8xbf16, #tpu.memory_space<vmem>>, %arg3: memref<9x8x8xbf16, #tpu.memory_space<vmem>>, %arg4: memref<1x8x256xf32, #tpu.memory_space<vmem>>) attributes {dimension_semantics = [#tpu.dimension_semantics<parallel>], iteration_bounds = array<i64: 2>, scalar_prefetch = 0 : i64, scratch_operands = 0 : i64, tpu.core_type = #tpu.core_type<tc>, window_params = [{transform_indices = @transform_0, window_bounds = array<i64: 1, 8, 256>}, {pipeline_mode = #tpu.pipeline_mode<synchronous>, transform_indices = @transform_1, window_bounds = array<i64: 9, 8, 8>}, {pipeline_mode = #tpu.pipeline_mode<synchronous>, transform_indices = @transform_2, window_bounds = array<i64: 9, 8, 8>}, {transform_indices = @transform_3, window_bounds = array<i64: 1, 8, 256>}]} {
    %c0 = arith.constant 0 : index
    %c0_0 = arith.constant 0 : index
    %c0_1 = arith.constant 0 : index
    %0 = vector.load %arg1[%c0, %c0_0, %c0_1] : memref<1x8x256xf32, #tpu.memory_space<vmem>>, vector<1x8x256xf32>
    %1 = vector.shape_cast %0 : vector<1x8x256xf32> to vector<8x256xf32>
    %2 = tpu.iota {dimensions = array<i32: 1>} : vector<1x256xi32>
    %c16_i32 = arith.constant 16 : i32
    %c0_i32 = arith.constant 0 : i32
    %3 = arith.cmpi eq, %c16_i32, %c0_i32 : i32
    %c1_i32 = arith.constant 1 : i32
    %4 = arith.select %3, %c1_i32, %c16_i32 : i32
    %5 = vector.broadcast %4 : i32 to vector<1x256xi32>
    %6 = arith.remsi %2, %5 : vector<1x256xi32>
    %c0_i32_2 = arith.constant 0 : i32
    %7 = vector.broadcast %c0_i32_2 : i32 to vector<1x256xi32>
    %8 = arith.cmpi ne, %6, %7 : vector<1x256xi32>
    %c0_i32_3 = arith.constant 0 : i32
    %9 = vector.broadcast %c0_i32_3 : i32 to vector<1x256xi32>
    %10 = arith.cmpi slt, %6, %9 : vector<1x256xi32>
    %c0_i32_4 = arith.constant 0 : i32
    %11 = arith.cmpi slt, %4, %c0_i32_4 : i32
    %12 = vector.broadcast %11 : i1 to vector<1x256xi1>
    %13 = vector.broadcast %12 : vector<1x256xi1> to vector<1x256xi1>
    %14 = arith.xori %10, %13 : vector<1x256xi1>
    %15 = arith.andi %14, %8 : vector<1x256xi1>
    %16 = vector.broadcast %4 : i32 to vector<1x256xi32>
    %17 = arith.addi %6, %16 : vector<1x256xi32>
    %18 = arith.select %15, %17, %6 : vector<1x256xi1>, vector<1x256xi32>
    %c16_i32_5 = arith.constant 16 : i32
    %19 = vector.broadcast %c16_i32_5 : i32 to vector<1x256xi32>
    %20 = arith.cmpi slt, %2, %19 : vector<1x256xi32>
    %c240_i32 = arith.constant 240 : i32
    %21 = vector.broadcast %c240_i32 : i32 to vector<1x256xi32>
    %22 = arith.cmpi sge, %2, %21 : vector<1x256xi32>
    %c0_i32_6 = arith.constant 0 : i32
    %23 = vector.broadcast %c0_i32_6 : i32 to vector<1x256xi32>
    %24 = arith.cmpi eq, %18, %23 : vector<1x256xi32>
    %c15_i32 = arith.constant 15 : i32
    %25 = vector.broadcast %c15_i32 : i32 to vector<1x256xi32>
    %26 = arith.cmpi eq, %18, %25 : vector<1x256xi32>
    %c16_i32_7 = arith.constant 16 : i32
    %27 = tpu.dynamic_rotate %1 by %c16_i32_7 dim 1 : vector<8x256xf32>, i32 -> vector<8x256xf32>
    %c240_i32_8 = arith.constant 240 : i32
    %28 = tpu.dynamic_rotate %1 by %c240_i32_8 dim 1 : vector<8x256xf32>, i32 -> vector<8x256xf32>
    %29 = vector.shape_cast %20 : vector<1x256xi1> to vector<1x256xi1>
    %30 = vector.broadcast %29 : vector<1x256xi1> to vector<8x256xi1>
    %31 = arith.select %30, %28, %27 : vector<8x256xi1>, vector<8x256xf32>
    %32 = vector.shape_cast %22 : vector<1x256xi1> to vector<1x256xi1>
    %33 = vector.broadcast %32 : vector<1x256xi1> to vector<8x256xi1>
    %34 = arith.select %33, %27, %28 : vector<8x256xi1>, vector<8x256xf32>
    %c1_i32_9 = arith.constant 1 : i32
    %35 = tpu.dynamic_rotate %31 by %c1_i32_9 dim 1 : vector<8x256xf32>, i32 -> vector<8x256xf32>
    %c255_i32 = arith.constant 255 : i32
    %36 = tpu.dynamic_rotate %31 by %c255_i32 dim 1 : vector<8x256xf32>, i32 -> vector<8x256xf32>
    %37 = vector.shape_cast %24 : vector<1x256xi1> to vector<1x256xi1>
    %38 = vector.broadcast %37 : vector<1x256xi1> to vector<8x256xi1>
    %39 = arith.select %38, %36, %35 : vector<8x256xi1>, vector<8x256xf32>
    %40 = vector.shape_cast %26 : vector<1x256xi1> to vector<1x256xi1>
    %41 = vector.broadcast %40 : vector<1x256xi1> to vector<8x256xi1>
    %42 = arith.select %41, %35, %36 : vector<8x256xi1>, vector<8x256xf32>
    %c0_10 = arith.constant 0 : index
    %c0_11 = arith.constant 0 : index
    %c0_12 = arith.constant 0 : index
    %43 = vector.load %arg2[%c0_10, %c0_11, %c0_12] : memref<9x8x8xbf16, #tpu.memory_space<vmem>>, vector<1x8x8xbf16>
    %44 = vector.shape_cast %43 : vector<1x8x8xbf16> to vector<8x8xbf16>
    %45 = arith.truncf %39 : vector<8x256xf32> to vector<8x256xbf16>
    %cst = arith.constant dense<0.000000e+00> : vector<8x256xf32>
    %46 = tpu.matmul %44, %45, %cst {dimension_numbers = #tpu.dot_dimension_numbers<[1], [0], [0], [1], [0, 0, 1, 1], [], []>} : vector<8x8xbf16>, vector<8x256xbf16>, vector<8x256xf32> -> vector<8x256xf32>
    %c1 = arith.constant 1 : index
    %c0_13 = arith.constant 0 : index
    %c0_14 = arith.constant 0 : index
    %47 = vector.load %arg2[%c1, %c0_13, %c0_14] : memref<9x8x8xbf16, #tpu.memory_space<vmem>>, vector<1x8x8xbf16>
    %48 = vector.shape_cast %47 : vector<1x8x8xbf16> to vector<8x8xbf16>
    %49 = arith.truncf %31 : vector<8x256xf32> to vector<8x256xbf16>
    %cst_15 = arith.constant dense<0.000000e+00> : vector<8x256xf32>
    %50 = tpu.matmul %48, %49, %cst_15 {dimension_numbers = #tpu.dot_dimension_numbers<[1], [0], [0], [1], [0, 0, 1, 1], [], []>} : vector<8x8xbf16>, vector<8x256xbf16>, vector<8x256xf32> -> vector<8x256xf32>
    %51 = arith.addf %46, %50 : vector<8x256xf32>
    %c2 = arith.constant 2 : index
    %c0_16 = arith.constant 0 : index
    %c0_17 = arith.constant 0 : index
    %52 = vector.load %arg2[%c2, %c0_16, %c0_17] : memref<9x8x8xbf16, #tpu.memory_space<vmem>>, vector<1x8x8xbf16>
    %53 = vector.shape_cast %52 : vector<1x8x8xbf16> to vector<8x8xbf16>
    %54 = arith.truncf %42 : vector<8x256xf32> to vector<8x256xbf16>
    %cst_18 = arith.constant dense<0.000000e+00> : vector<8x256xf32>
    %55 = tpu.matmul %53, %54, %cst_18 {dimension_numbers = #tpu.dot_dimension_numbers<[1], [0], [0], [1], [0, 0, 1, 1], [], []>} : vector<8x8xbf16>, vector<8x256xbf16>, vector<8x256xf32> -> vector<8x256xf32>
    %56 = arith.addf %51, %55 : vector<8x256xf32>
    %c1_i32_19 = arith.constant 1 : i32
    %57 = tpu.dynamic_rotate %1 by %c1_i32_19 dim 1 : vector<8x256xf32>, i32 -> vector<8x256xf32>
    %c255_i32_20 = arith.constant 255 : i32
    %58 = tpu.dynamic_rotate %1 by %c255_i32_20 dim 1 : vector<8x256xf32>, i32 -> vector<8x256xf32>
    %59 = vector.shape_cast %24 : vector<1x256xi1> to vector<1x256xi1>
    %60 = vector.broadcast %59 : vector<1x256xi1> to vector<8x256xi1>
    %61 = arith.select %60, %58, %57 : vector<8x256xi1>, vector<8x256xf32>
    %62 = vector.shape_cast %26 : vector<1x256xi1> to vector<1x256xi1>
    %63 = vector.broadcast %62 : vector<1x256xi1> to vector<8x256xi1>
    %64 = arith.select %63, %57, %58 : vector<8x256xi1>, vector<8x256xf32>
    %c3 = arith.constant 3 : index
    %c0_21 = arith.constant 0 : index
    %c0_22 = arith.constant 0 : index
    %65 = vector.load %arg2[%c3, %c0_21, %c0_22] : memref<9x8x8xbf16, #tpu.memory_space<vmem>>, vector<1x8x8xbf16>
    %66 = vector.shape_cast %65 : vector<1x8x8xbf16> to vector<8x8xbf16>
    %67 = arith.truncf %61 : vector<8x256xf32> to vector<8x256xbf16>
    %cst_23 = arith.constant dense<0.000000e+00> : vector<8x256xf32>
    %68 = tpu.matmul %66, %67, %cst_23 {dimension_numbers = #tpu.dot_dimension_numbers<[1], [0], [0], [1], [0, 0, 1, 1], [], []>} : vector<8x8xbf16>, vector<8x256xbf16>, vector<8x256xf32> -> vector<8x256xf32>
    %69 = arith.addf %56, %68 : vector<8x256xf32>
    %c4 = arith.constant 4 : index
    %c0_24 = arith.constant 0 : index
    %c0_25 = arith.constant 0 : index
    %70 = vector.load %arg2[%c4, %c0_24, %c0_25] : memref<9x8x8xbf16, #tpu.memory_space<vmem>>, vector<1x8x8xbf16>
    %71 = vector.shape_cast %70 : vector<1x8x8xbf16> to vector<8x8xbf16>
    %72 = arith.truncf %1 : vector<8x256xf32> to vector<8x256xbf16>
    %cst_26 = arith.constant dense<0.000000e+00> : vector<8x256xf32>
    %73 = tpu.matmul %71, %72, %cst_26 {dimension_numbers = #tpu.dot_dimension_numbers<[1], [0], [0], [1], [0, 0, 1, 1], [], []>} : vector<8x8xbf16>, vector<8x256xbf16>, vector<8x256xf32> -> vector<8x256xf32>
    %74 = arith.addf %69, %73 : vector<8x256xf32>
    %c5 = arith.constant 5 : index
    %c0_27 = arith.constant 0 : index
    %c0_28 = arith.constant 0 : index
    %75 = vector.load %arg2[%c5, %c0_27, %c0_28] : memref<9x8x8xbf16, #tpu.memory_space<vmem>>, vector<1x8x8xbf16>
    %76 = vector.shape_cast %75 : vector<1x8x8xbf16> to vector<8x8xbf16>
    %77 = arith.truncf %64 : vector<8x256xf32> to vector<8x256xbf16>
    %cst_29 = arith.constant dense<0.000000e+00> : vector<8x256xf32>
    %78 = tpu.matmul %76, %77, %cst_29 {dimension_numbers = #tpu.dot_dimension_numbers<[1], [0], [0], [1], [0, 0, 1, 1], [], []>} : vector<8x8xbf16>, vector<8x256xbf16>, vector<8x256xf32> -> vector<8x256xf32>
    %79 = arith.addf %74, %78 : vector<8x256xf32>
    %c1_i32_30 = arith.constant 1 : i32
    %80 = tpu.dynamic_rotate %34 by %c1_i32_30 dim 1 : vector<8x256xf32>, i32 -> vector<8x256xf32>
    %c255_i32_31 = arith.constant 255 : i32
    %81 = tpu.dynamic_rotate %34 by %c255_i32_31 dim 1 : vector<8x256xf32>, i32 -> vector<8x256xf32>
    %82 = vector.shape_cast %24 : vector<1x256xi1> to vector<1x256xi1>
    %83 = vector.broadcast %82 : vector<1x256xi1> to vector<8x256xi1>
    %84 = arith.select %83, %81, %80 : vector<8x256xi1>, vector<8x256xf32>
    %85 = vector.shape_cast %26 : vector<1x256xi1> to vector<1x256xi1>
    %86 = vector.broadcast %85 : vector<1x256xi1> to vector<8x256xi1>
    %87 = arith.select %86, %80, %81 : vector<8x256xi1>, vector<8x256xf32>
    %c6 = arith.constant 6 : index
    %c0_32 = arith.constant 0 : index
    %c0_33 = arith.constant 0 : index
    %88 = vector.load %arg2[%c6, %c0_32, %c0_33] : memref<9x8x8xbf16, #tpu.memory_space<vmem>>, vector<1x8x8xbf16>
    %89 = vector.shape_cast %88 : vector<1x8x8xbf16> to vector<8x8xbf16>
    %90 = arith.truncf %84 : vector<8x256xf32> to vector<8x256xbf16>
    %cst_34 = arith.constant dense<0.000000e+00> : vector<8x256xf32>
    %91 = tpu.matmul %89, %90, %cst_34 {dimension_numbers = #tpu.dot_dimension_numbers<[1], [0], [0], [1], [0, 0, 1, 1], [], []>} : vector<8x8xbf16>, vector<8x256xbf16>, vector<8x256xf32> -> vector<8x256xf32>
    %92 = arith.addf %79, %91 : vector<8x256xf32>
    %c7 = arith.constant 7 : index
    %c0_35 = arith.constant 0 : index
    %c0_36 = arith.constant 0 : index
    %93 = vector.load %arg2[%c7, %c0_35, %c0_36] : memref<9x8x8xbf16, #tpu.memory_space<vmem>>, vector<1x8x8xbf16>
    %94 = vector.shape_cast %93 : vector<1x8x8xbf16> to vector<8x8xbf16>
    %95 = arith.truncf %34 : vector<8x256xf32> to vector<8x256xbf16>
    %cst_37 = arith.constant dense<0.000000e+00> : vector<8x256xf32>
    %96 = tpu.matmul %94, %95, %cst_37 {dimension_numbers = #tpu.dot_dimension_numbers<[1], [0], [0], [1], [0, 0, 1, 1], [], []>} : vector<8x8xbf16>, vector<8x256xbf16>, vector<8x256xf32> -> vector<8x256xf32>
    %97 = arith.addf %92, %96 : vector<8x256xf32>
    %c8 = arith.constant 8 : index
    %c0_38 = arith.constant 0 : index
    %c0_39 = arith.constant 0 : index
    %98 = vector.load %arg2[%c8, %c0_38, %c0_39] : memref<9x8x8xbf16, #tpu.memory_space<vmem>>, vector<1x8x8xbf16>
    %99 = vector.shape_cast %98 : vector<1x8x8xbf16> to vector<8x8xbf16>
    %100 = arith.truncf %87 : vector<8x256xf32> to vector<8x256xbf16>
    %cst_40 = arith.constant dense<0.000000e+00> : vector<8x256xf32>
    %101 = tpu.matmul %99, %100, %cst_40 {dimension_numbers = #tpu.dot_dimension_numbers<[1], [0], [0], [1], [0, 0, 1, 1], [], []>} : vector<8x8xbf16>, vector<8x256xbf16>, vector<8x256xf32> -> vector<8x256xf32>
    %102 = arith.addf %97, %101 : vector<8x256xf32>
    %cst_41 = arith.constant dense<0.000000e+00> : vector<8xf32>
    %103 = vector.multi_reduction <add>, %102, %cst_41 [1] : vector<8x256xf32> to vector<8xf32>
    %104 = vector.shape_cast %103 : vector<8xf32> to vector<8x1xf32>
    %105 = arith.mulf %102, %102 : vector<8x256xf32>
    %cst_42 = arith.constant dense<0.000000e+00> : vector<8xf32>
    %106 = vector.multi_reduction <add>, %105, %cst_42 [1] : vector<8x256xf32> to vector<8xf32>
    %107 = vector.shape_cast %106 : vector<8xf32> to vector<8x1xf32>
    %cst_43 = arith.constant 3.906250e-03 : f32
    %108 = vector.broadcast %cst_43 : f32 to vector<8x1xf32>
    %109 = arith.mulf %104, %108 : vector<8x1xf32>
    %cst_44 = arith.constant 3.906250e-03 : f32
    %110 = vector.broadcast %cst_44 : f32 to vector<8x1xf32>
    %111 = arith.mulf %107, %110 : vector<8x1xf32>
    %112 = arith.mulf %109, %109 : vector<8x1xf32>
    %113 = arith.subf %111, %112 : vector<8x1xf32>
    %cst_45 = arith.constant 0.000000e+00 : f32
    %114 = vector.broadcast %cst_45 : f32 to vector<8x1xf32>
    %115 = arith.maximumf %113, %114 : vector<8x1xf32>
    %116 = vector.broadcast %109 : vector<8x1xf32> to vector<8x256xf32>
    %117 = arith.subf %102, %116 : vector<8x256xf32>
    %cst_46 = arith.constant 9.99999974E-6 : f32
    %118 = vector.broadcast %cst_46 : f32 to vector<8x1xf32>
    %119 = arith.addf %115, %118 : vector<8x1xf32>
    %120 = math.rsqrt %119 : vector<8x1xf32>
    %121 = vector.broadcast %120 : vector<8x1xf32> to vector<8x256xf32>
    %122 = arith.mulf %117, %121 : vector<8x256xf32>
    %cst_47 = arith.constant 0.000000e+00 : f32
    %123 = vector.broadcast %cst_47 : f32 to vector<8x256xf32>
    %124 = arith.maximumf %122, %123 : vector<8x256xf32>
    %c16_i32_48 = arith.constant 16 : i32
    %125 = tpu.dynamic_rotate %124 by %c16_i32_48 dim 1 : vector<8x256xf32>, i32 -> vector<8x256xf32>
    %c240_i32_49 = arith.constant 240 : i32
    %126 = tpu.dynamic_rotate %124 by %c240_i32_49 dim 1 : vector<8x256xf32>, i32 -> vector<8x256xf32>
    %127 = vector.shape_cast %20 : vector<1x256xi1> to vector<1x256xi1>
    %128 = vector.broadcast %127 : vector<1x256xi1> to vector<8x256xi1>
    %129 = arith.select %128, %126, %125 : vector<8x256xi1>, vector<8x256xf32>
    %130 = vector.shape_cast %22 : vector<1x256xi1> to vector<1x256xi1>
    %131 = vector.broadcast %130 : vector<1x256xi1> to vector<8x256xi1>
    %132 = arith.select %131, %125, %126 : vector<8x256xi1>, vector<8x256xf32>
    %c1_i32_50 = arith.constant 1 : i32
    %133 = tpu.dynamic_rotate %129 by %c1_i32_50 dim 1 : vector<8x256xf32>, i32 -> vector<8x256xf32>
    %c255_i32_51 = arith.constant 255 : i32
    %134 = tpu.dynamic_rotate %129 by %c255_i32_51 dim 1 : vector<8x256xf32>, i32 -> vector<8x256xf32>
    %135 = vector.shape_cast %24 : vector<1x256xi1> to vector<1x256xi1>
    %136 = vector.broadcast %135 : vector<1x256xi1> to vector<8x256xi1>
    %137 = arith.select %136, %134, %133 : vector<8x256xi1>, vector<8x256xf32>
    %138 = vector.shape_cast %26 : vector<1x256xi1> to vector<1x256xi1>
    %139 = vector.broadcast %138 : vector<1x256xi1> to vector<8x256xi1>
    %140 = arith.select %139, %133, %134 : vector<8x256xi1>, vector<8x256xf32>
    %c0_52 = arith.constant 0 : index
    %c0_53 = arith.constant 0 : index
    %c0_54 = arith.constant 0 : index
    %141 = vector.load %arg3[%c0_52, %c0_53, %c0_54] : memref<9x8x8xbf16, #tpu.memory_space<vmem>>, vector<1x8x8xbf16>
    %142 = vector.shape_cast %141 : vector<1x8x8xbf16> to vector<8x8xbf16>
    %143 = arith.truncf %137 : vector<8x256xf32> to vector<8x256xbf16>
    %cst_55 = arith.constant dense<0.000000e+00> : vector<8x256xf32>
    %144 = tpu.matmul %142, %143, %cst_55 {dimension_numbers = #tpu.dot_dimension_numbers<[1], [0], [0], [1], [0, 0, 1, 1], [], []>} : vector<8x8xbf16>, vector<8x256xbf16>, vector<8x256xf32> -> vector<8x256xf32>
    %c1_56 = arith.constant 1 : index
    %c0_57 = arith.constant 0 : index
    %c0_58 = arith.constant 0 : index
    %145 = vector.load %arg3[%c1_56, %c0_57, %c0_58] : memref<9x8x8xbf16, #tpu.memory_space<vmem>>, vector<1x8x8xbf16>
    %146 = vector.shape_cast %145 : vector<1x8x8xbf16> to vector<8x8xbf16>
    %147 = arith.truncf %129 : vector<8x256xf32> to vector<8x256xbf16>
    %cst_59 = arith.constant dense<0.000000e+00> : vector<8x256xf32>
    %148 = tpu.matmul %146, %147, %cst_59 {dimension_numbers = #tpu.dot_dimension_numbers<[1], [0], [0], [1], [0, 0, 1, 1], [], []>} : vector<8x8xbf16>, vector<8x256xbf16>, vector<8x256xf32> -> vector<8x256xf32>
    %149 = arith.addf %144, %148 : vector<8x256xf32>
    %c2_60 = arith.constant 2 : index
    %c0_61 = arith.constant 0 : index
    %c0_62 = arith.constant 0 : index
    %150 = vector.load %arg3[%c2_60, %c0_61, %c0_62] : memref<9x8x8xbf16, #tpu.memory_space<vmem>>, vector<1x8x8xbf16>
    %151 = vector.shape_cast %150 : vector<1x8x8xbf16> to vector<8x8xbf16>
    %152 = arith.truncf %140 : vector<8x256xf32> to vector<8x256xbf16>
    %cst_63 = arith.constant dense<0.000000e+00> : vector<8x256xf32>
    %153 = tpu.matmul %151, %152, %cst_63 {dimension_numbers = #tpu.dot_dimension_numbers<[1], [0], [0], [1], [0, 0, 1, 1], [], []>} : vector<8x8xbf16>, vector<8x256xbf16>, vector<8x256xf32> -> vector<8x256xf32>
    %154 = arith.addf %149, %153 : vector<8x256xf32>
    %c1_i32_64 = arith.constant 1 : i32
    %155 = tpu.dynamic_rotate %124 by %c1_i32_64 dim 1 : vector<8x256xf32>, i32 -> vector<8x256xf32>
    %c255_i32_65 = arith.constant 255 : i32
    %156 = tpu.dynamic_rotate %124 by %c255_i32_65 dim 1 : vector<8x256xf32>, i32 -> vector<8x256xf32>
    %157 = vector.shape_cast %24 : vector<1x256xi1> to vector<1x256xi1>
    %158 = vector.broadcast %157 : vector<1x256xi1> to vector<8x256xi1>
    %159 = arith.select %158, %156, %155 : vector<8x256xi1>, vector<8x256xf32>
    %160 = vector.shape_cast %26 : vector<1x256xi1> to vector<1x256xi1>
    %161 = vector.broadcast %160 : vector<1x256xi1> to vector<8x256xi1>
    %162 = arith.select %161, %155, %156 : vector<8x256xi1>, vector<8x256xf32>
    %c3_66 = arith.constant 3 : index
    %c0_67 = arith.constant 0 : index
    %c0_68 = arith.constant 0 : index
    %163 = vector.load %arg3[%c3_66, %c0_67, %c0_68] : memref<9x8x8xbf16, #tpu.memory_space<vmem>>, vector<1x8x8xbf16>
    %164 = vector.shape_cast %163 : vector<1x8x8xbf16> to vector<8x8xbf16>
    %165 = arith.truncf %159 : vector<8x256xf32> to vector<8x256xbf16>
    %cst_69 = arith.constant dense<0.000000e+00> : vector<8x256xf32>
    %166 = tpu.matmul %164, %165, %cst_69 {dimension_numbers = #tpu.dot_dimension_numbers<[1], [0], [0], [1], [0, 0, 1, 1], [], []>} : vector<8x8xbf16>, vector<8x256xbf16>, vector<8x256xf32> -> vector<8x256xf32>
    %167 = arith.addf %154, %166 : vector<8x256xf32>
    %c4_70 = arith.constant 4 : index
    %c0_71 = arith.constant 0 : index
    %c0_72 = arith.constant 0 : index
    %168 = vector.load %arg3[%c4_70, %c0_71, %c0_72] : memref<9x8x8xbf16, #tpu.memory_space<vmem>>, vector<1x8x8xbf16>
    %169 = vector.shape_cast %168 : vector<1x8x8xbf16> to vector<8x8xbf16>
    %170 = arith.truncf %124 : vector<8x256xf32> to vector<8x256xbf16>
    %cst_73 = arith.constant dense<0.000000e+00> : vector<8x256xf32>
    %171 = tpu.matmul %169, %170, %cst_73 {dimension_numbers = #tpu.dot_dimension_numbers<[1], [0], [0], [1], [0, 0, 1, 1], [], []>} : vector<8x8xbf16>, vector<8x256xbf16>, vector<8x256xf32> -> vector<8x256xf32>
    %172 = arith.addf %167, %171 : vector<8x256xf32>
    %c5_74 = arith.constant 5 : index
    %c0_75 = arith.constant 0 : index
    %c0_76 = arith.constant 0 : index
    %173 = vector.load %arg3[%c5_74, %c0_75, %c0_76] : memref<9x8x8xbf16, #tpu.memory_space<vmem>>, vector<1x8x8xbf16>
    %174 = vector.shape_cast %173 : vector<1x8x8xbf16> to vector<8x8xbf16>
    %175 = arith.truncf %162 : vector<8x256xf32> to vector<8x256xbf16>
    %cst_77 = arith.constant dense<0.000000e+00> : vector<8x256xf32>
    %176 = tpu.matmul %174, %175, %cst_77 {dimension_numbers = #tpu.dot_dimension_numbers<[1], [0], [0], [1], [0, 0, 1, 1], [], []>} : vector<8x8xbf16>, vector<8x256xbf16>, vector<8x256xf32> -> vector<8x256xf32>
    %177 = arith.addf %172, %176 : vector<8x256xf32>
    %c1_i32_78 = arith.constant 1 : i32
    %178 = tpu.dynamic_rotate %132 by %c1_i32_78 dim 1 : vector<8x256xf32>, i32 -> vector<8x256xf32>
    %c255_i32_79 = arith.constant 255 : i32
    %179 = tpu.dynamic_rotate %132 by %c255_i32_79 dim 1 : vector<8x256xf32>, i32 -> vector<8x256xf32>
    %180 = vector.shape_cast %24 : vector<1x256xi1> to vector<1x256xi1>
    %181 = vector.broadcast %180 : vector<1x256xi1> to vector<8x256xi1>
    %182 = arith.select %181, %179, %178 : vector<8x256xi1>, vector<8x256xf32>
    %183 = vector.shape_cast %26 : vector<1x256xi1> to vector<1x256xi1>
    %184 = vector.broadcast %183 : vector<1x256xi1> to vector<8x256xi1>
    %185 = arith.select %184, %178, %179 : vector<8x256xi1>, vector<8x256xf32>
    %c6_80 = arith.constant 6 : index
    %c0_81 = arith.constant 0 : index
    %c0_82 = arith.constant 0 : index
    %186 = vector.load %arg3[%c6_80, %c0_81, %c0_82] : memref<9x8x8xbf16, #tpu.memory_space<vmem>>, vector<1x8x8xbf16>
    %187 = vector.shape_cast %186 : vector<1x8x8xbf16> to vector<8x8xbf16>
    %188 = arith.truncf %182 : vector<8x256xf32> to vector<8x256xbf16>
    %cst_83 = arith.constant dense<0.000000e+00> : vector<8x256xf32>
    %189 = tpu.matmul %187, %188, %cst_83 {dimension_numbers = #tpu.dot_dimension_numbers<[1], [0], [0], [1], [0, 0, 1, 1], [], []>} : vector<8x8xbf16>, vector<8x256xbf16>, vector<8x256xf32> -> vector<8x256xf32>
    %190 = arith.addf %177, %189 : vector<8x256xf32>
    %c7_84 = arith.constant 7 : index
    %c0_85 = arith.constant 0 : index
    %c0_86 = arith.constant 0 : index
    %191 = vector.load %arg3[%c7_84, %c0_85, %c0_86] : memref<9x8x8xbf16, #tpu.memory_space<vmem>>, vector<1x8x8xbf16>
    %192 = vector.shape_cast %191 : vector<1x8x8xbf16> to vector<8x8xbf16>
    %193 = arith.truncf %132 : vector<8x256xf32> to vector<8x256xbf16>
    %cst_87 = arith.constant dense<0.000000e+00> : vector<8x256xf32>
    %194 = tpu.matmul %192, %193, %cst_87 {dimension_numbers = #tpu.dot_dimension_numbers<[1], [0], [0], [1], [0, 0, 1, 1], [], []>} : vector<8x8xbf16>, vector<8x256xbf16>, vector<8x256xf32> -> vector<8x256xf32>
    %195 = arith.addf %190, %194 : vector<8x256xf32>
    %c8_88 = arith.constant 8 : index
    %c0_89 = arith.constant 0 : index
    %c0_90 = arith.constant 0 : index
    %196 = vector.load %arg3[%c8_88, %c0_89, %c0_90] : memref<9x8x8xbf16, #tpu.memory_space<vmem>>, vector<1x8x8xbf16>
    %197 = vector.shape_cast %196 : vector<1x8x8xbf16> to vector<8x8xbf16>
    %198 = arith.truncf %185 : vector<8x256xf32> to vector<8x256xbf16>
    %cst_91 = arith.constant dense<0.000000e+00> : vector<8x256xf32>
    %199 = tpu.matmul %197, %198, %cst_91 {dimension_numbers = #tpu.dot_dimension_numbers<[1], [0], [0], [1], [0, 0, 1, 1], [], []>} : vector<8x8xbf16>, vector<8x256xbf16>, vector<8x256xf32> -> vector<8x256xf32>
    %200 = arith.addf %195, %199 : vector<8x256xf32>
    %cst_92 = arith.constant dense<0.000000e+00> : vector<8xf32>
    %201 = vector.multi_reduction <add>, %200, %cst_92 [1] : vector<8x256xf32> to vector<8xf32>
    %202 = vector.shape_cast %201 : vector<8xf32> to vector<8x1xf32>
    %203 = arith.mulf %200, %200 : vector<8x256xf32>
    %cst_93 = arith.constant dense<0.000000e+00> : vector<8xf32>
    %204 = vector.multi_reduction <add>, %203, %cst_93 [1] : vector<8x256xf32> to vector<8xf32>
    %205 = vector.shape_cast %204 : vector<8xf32> to vector<8x1xf32>
    %cst_94 = arith.constant 3.906250e-03 : f32
    %206 = vector.broadcast %cst_94 : f32 to vector<8x1xf32>
    %207 = arith.mulf %202, %206 : vector<8x1xf32>
    %cst_95 = arith.constant 3.906250e-03 : f32
    %208 = vector.broadcast %cst_95 : f32 to vector<8x1xf32>
    %209 = arith.mulf %205, %208 : vector<8x1xf32>
    %210 = arith.mulf %207, %207 : vector<8x1xf32>
    %211 = arith.subf %209, %210 : vector<8x1xf32>
    %cst_96 = arith.constant 0.000000e+00 : f32
    %212 = vector.broadcast %cst_96 : f32 to vector<8x1xf32>
    %213 = arith.maximumf %211, %212 : vector<8x1xf32>
    %214 = vector.broadcast %207 : vector<8x1xf32> to vector<8x256xf32>
    %215 = arith.subf %200, %214 : vector<8x256xf32>
    %cst_97 = arith.constant 9.99999974E-6 : f32
    %216 = vector.broadcast %cst_97 : f32 to vector<8x1xf32>
    %217 = arith.addf %213, %216 : vector<8x1xf32>
    %218 = math.rsqrt %217 : vector<8x1xf32>
    %219 = vector.broadcast %218 : vector<8x1xf32> to vector<8x256xf32>
    %220 = arith.mulf %215, %219 : vector<8x256xf32>
    %221 = arith.addf %1, %220 : vector<8x256xf32>
    %c0_98 = arith.constant 0 : index
    %c0_99 = arith.constant 0 : index
    %c0_100 = arith.constant 0 : index
    %222 = vector.load %arg4[%c0_98, %c0_99, %c0_100] : memref<1x8x256xf32, #tpu.memory_space<vmem>>, vector<1x8x256xf32>
    %223 = vector.shape_cast %222 : vector<1x8x256xf32> to vector<8x256xf32>
    %224 = vector.shape_cast %221 : vector<8x256xf32> to vector<1x8x256xf32>
    tpu.vector_store %arg4[%c0_98, %c0_99, %c0_100], %224 {strides = array<i32>} : memref<1x8x256xf32, #tpu.memory_space<vmem>>, vector<1x8x256xf32>,
    return
  }
  func.func @transform_0(%arg0: i32) -> (i32, i32, i32) {
    %c0_i32 = arith.constant 0 : i32
    %c0_i32_0 = arith.constant 0 : i32
    %c0_i32_1 = arith.constant 0 : i32
    return %arg0, %c0_i32, %c0_i32_0 : i32, i32, i32
  }
  func.func @transform_1(%arg0: i32) -> (i32, i32, i32) {
    %c0_i32 = arith.constant 0 : i32
    %c0_i32_0 = arith.constant 0 : i32
    %c0_i32_1 = arith.constant 0 : i32
    %c0_i32_2 = arith.constant 0 : i32
    return %c0_i32, %c0_i32_0, %c0_i32_1 : i32, i32, i32
  }
  func.func @transform_2(%arg0: i32) -> (i32, i32, i32) {
    %c0_i32 = arith.constant 0 : i32
    %c0_i32_0 = arith.constant 0 : i32
    %c0_i32_1 = arith.constant 0 : i32
    %c0_i32_2 = arith.constant 0 : i32
    return %c0_i32, %c0_i32_0, %c0_i32_1 : i32, i32, i32
  }
  func.func @transform_3(%arg0: i32) -> (i32, i32, i32) {
    %c0_i32 = arith.constant 0 : i32
    %c0_i32_0 = arith.constant 0 : i32
    %c0_i32_1 = arith.constant 0 : i32
    return %arg0, %c0_i32, %c0_i32_0 : i32, i32, i32
  }
}

</mosaic_0001>

<llo_original>
// kernel: tpu_custom_call.1
$region0: #{tpu_custom_call.1}
  #allocation0 [shape = 'u32[]', space=smem, size = 0x4, offset = 0x4, fixed_abs, tag = 'smem constant byte address 0x4 - core index']
  #allocation1 [shape = 'u32[144,128]{1,0:T(1,128)}', space=vmem, size = 0x12000, scoped, tag = 'internal scratch']
  %s0 = inlined_call_operand.vmem [shape: f32[2,8,256], index: 0, kind: input, shape index: {}]
  %s1 = inlined_call_operand.vmem [shape: bf16[9,8,8], index: 1, kind: input, shape index: {}]
  %s2 = inlined_call_operand.vmem [shape: bf16[9,8,8], index: 2, kind: input, shape index: {}]
  %s3 = inlined_call_operand.hbm [shape: f32[2,8,256], index: 3, kind: output, shape index: {}]
  %s4 = sld [smem:[#allocation0]]
  $region45: #{tpu_custom_call.1} parent=0
    _
  %s6 = ssub.s32 1, %s4
  %s7 = scalar_select 0, %s6, %s4
  $region1: #{tpu_custom_call.1} parent=0
    #allocation2 [shape = 'u8[16384]{0}', space=vmem, size = 0x4000, scoped, tag = 'output window, operand 0']
    #allocation3 [shape = 's32[2]{0}', space=sflag, size = 0x8, scoped, tag = 'scoped memory for tpu_custom_call.1']
    %8 = vsyncpa [#allocation3], 0
    %s9 = scalar_lea.sflag [#allocation3], 1
    %10 = vsyncpa %s9, 0
    loop: start=0, step=1, limit=4
    $region2: #{tpu_custom_call.1} parent=1 // loop_pre_header
      _
    $region3: #{tpu_custom_call.1} parent=1 // loop_header
      %s12 = sphi 0, %s16
      %p13 = scmp.ge.s32.totalorder %s12, 4
      %s22 = sphi 0, %s24
      %s25 = sphi 0, %s22
      %s26 = sphi 0, %s25
      %s42 = sphi 0, %s26
      %s46 = sphi 0, %s46
      %s48 = sphi 0, %s46
      %s49 = sphi 0, %s48
      %s63 = sphi 0, %s49
      %s67 = sphi 0, %s67
      %s69 = sphi 0, %s67
      %s70 = sphi 0, %s69
      %s84 = sphi 0, %s70
      %s90 = sphi 0, %s92
      %s93 = sphi 0, %s90
      %s94 = sphi 0, %s93
      %s110 = sphi 0, %s94
    $region4: #{tpu_custom_call.1} parent=1 // loop_header_branch
      %15 = sbr.rel (%p13) target = $region8
    $region5: #{tpu_custom_call.1} parent=1 // loop_body
      %s17 = ssub.s32 %s12, 1
      %s18 = ssub.s32 %s12, 2
      %s19 = sadd.s32 %s12, 1
      %s20 = ssub.s32 %s12, %s19
      %p21 = scmp.eq.s32.totalorder %s20, 0
      %s23 = sadd.s32 %s22, 1
      %s24 = scalar_select %p21, %s22, %s23
      %p27 = pneg %p21
      %p28 = scmp.eq.s32.totalorder %s12, 1
      %p29 = por %p27, %p28
      %p30 = scmp.ne.s32.totalorder %s22, %s25
      %p31 = scmp.eq.s32.totalorder %s12, 0
      %p32 = por %p30, %p31
      %p33 = scmp.ne.s32.totalorder %s22, %s25
      %p34 = scmp.eq.s32.totalorder %s17, 1
      %p35 = por %p33, %p34
      %p36 = scmp.ne.s32.totalorder %s25, %s26
      %p37 = scmp.eq.s32.totalorder %s17, 0
      %p38 = por %p36, %p37
      %p39 = scmp.ne.s32.totalorder %s25, %s26
      %p40 = scmp.eq.s32.totalorder %s18, 1
      %p41 = por %p39, %p40
      %p43 = scmp.ne.s32.totalorder %s26, %s42
      %p44 = scmp.eq.s32.totalorder %s18, 0
      %p45 = por %p43, %p44
      %s47 = sadd.s32 %s46, 1
      %p50 = scmp.eq.s32.totalorder %s12, 1
      %p51 = scmp.ne.s32.totalorder %s46, %s48
      %p52 = scmp.eq.s32.totalorder %s12, 0
      %p53 = por %p51, %p52
      %p54 = scmp.ne.s32.totalorder %s46, %s48
      %p55 = scmp.eq.s32.totalorder %s17, 1
      %p56 = por %p54, %p55
      %p57 = scmp.ne.s32.totalorder %s48, %s49
      %p58 = scmp.eq.s32.totalorder %s17, 0
      %p59 = por %p57, %p58
      %p60 = scmp.ne.s32.totalorder %s48, %s49
      %p61 = scmp.eq.s32.totalorder %s18, 1
      %p62 = por %p60, %p61
      %p64 = scmp.ne.s32.totalorder %s49, %s63
      %p65 = scmp.eq.s32.totalorder %s18, 0
      %p66 = por %p64, %p65
      %s68 = sadd.s32 %s67, 1
      %p71 = scmp.eq.s32.totalorder %s12, 1
      %p72 = scmp.ne.s32.totalorder %s67, %s69
      %p73 = scmp.eq.s32.totalorder %s12, 0
      %p74 = por %p72, %p73
      %p75 = scmp.ne.s32.totalorder %s67, %s69
      %p76 = scmp.eq.s32.totalorder %s17, 1
      %p77 = por %p75, %p76
      %p78 = scmp.ne.s32.totalorder %s69, %s70
      %p79 = scmp.eq.s32.totalorder %s17, 0
      %p80 = por %p78, %p79
      %p81 = scmp.ne.s32.totalorder %s69, %s70
      %p82 = scmp.eq.s32.totalorder %s18, 1
      %p83 = por %p81, %p82
      %p85 = scmp.ne.s32.totalorder %s70, %s84
      %p86 = scmp.eq.s32.totalorder %s18, 0
      %p87 = por %p85, %p86
      %s88 = ssub.s32 %s12, %s19
      %p89 = scmp.eq.s32.totalorder %s88, 0
      %s91 = sadd.s32 %s90, 1
      %s92 = scalar_select %p89, %s90, %s91
      %p95 = pneg %p89
      %p96 = scmp.eq.s32.totalorder %s12, 1
      %p97 = por %p95, %p96
      %p98 = scmp.ne.s32.totalorder %s90, %s93
      %p99 = scmp.eq.s32.totalorder %s12, 0
      %p100 = por %p98, %p99
      %p101 = scmp.ne.s32.totalorder %s90, %s93
      %p102 = scmp.eq.s32.totalorder %s17, 1
      %p103 = por %p101, %p102
      %p104 = scmp.ne.s32.totalorder %s93, %s94
      %p105 = scmp.eq.s32.totalorder %s17, 0
      %p106 = por %p104, %p105
      %p107 = scmp.ne.s32.totalorder %s93, %s94
      %p108 = scmp.eq.s32.totalorder %s18, 1
      %p109 = por %p107, %p108
      %p111 = scmp.ne.s32.totalorder %s94, %s110
      %p112 = scmp.eq.s32.totalorder %s18, 0
      %p113 = por %p111, %p112
      %p114 = scmp.le.s32.totalorder 1, %s12
      %p115 = scmp.lt.s32.totalorder %s12, 3
      %p116 = pnand %p114, %p115
      %p117 = pneg %p116
      // Predicated region
      $region9: #{tpu_custom_call.1} parent=5 // pred_check
        _
      $region10: #{tpu_custom_call.1} parent=5 // pred_check_branch
        %119 = sbr.rel (%p116) target = $region12
      $region11: #{tpu_custom_call.1} parent=5 // pred_region
        %s120 = ssub.s32 %s12, 1
        // Predicated region
        $region13: #{tpu_custom_call.1} parent=11 // pred_check
          %p121 = pneg %p59
        $region14: #{tpu_custom_call.1} parent=11 // pred_check_branch
          %123 = sbr.rel (%p121) target = $region16
        $region15: #{tpu_custom_call.1} parent=11 // pred_region
          _
        $region16: #{tpu_custom_call.1} parent=11 // pred_fallthru
          _
        // Predicated region
        $region17: #{tpu_custom_call.1} parent=11 // pred_check
          %p124 = pneg %p80
        $region18: #{tpu_custom_call.1} parent=11 // pred_check_branch
          %126 = sbr.rel (%p124) target = $region20
        $region19: #{tpu_custom_call.1} parent=11 // pred_region
          _
        $region20: #{tpu_custom_call.1} parent=11 // pred_fallthru
          _
      $region12: #{tpu_custom_call.1} parent=5 // pred_fallthru
        _
      %p127 = scmp.lt.s32.totalorder %s12, 2
      // Predicated region
      $region21: #{tpu_custom_call.1} parent=5 // pred_check
        %p128 = pneg %p127
      $region22: #{tpu_custom_call.1} parent=5 // pred_check_branch
        %130 = sbr.rel (%p128) target = $region24
      $region23: #{tpu_custom_call.1} parent=5 // pred_region
        // Predicated region
        $region25: #{tpu_custom_call.1} parent=23 // pred_check
          %p131 = pneg %p32
        $region26: #{tpu_custom_call.1} parent=23 // pred_check_branch
          %133 = sbr.rel (%p131) target = $region28
        $region27: #{tpu_custom_call.1} parent=23 // pred_region
          %p134 = scmp.lt.s32.totalorder %s12, 1
          %s135 = scalar_select %p134, %s12, 1
          %s136 = smul.addr %s135, 2
          %s137 = smul.addr %s136, 8
          %s138 = scalar_lea.vmem %s0, %s137
        $region28: #{tpu_custom_call.1} parent=23 // pred_fallthru
          _
      $region24: #{tpu_custom_call.1} parent=5 // pred_fallthru
        _
      %p139 = scmp.le.s32.totalorder 1, %s12
      %p140 = scmp.lt.s32.totalorder %s12, 3
      %p141 = pnand %p139, %p140
      %p142 = pneg %p141
      // Predicated region
      $region29: #{tpu_custom_call.1} parent=5 // pred_check
        _
      $region30: #{tpu_custom_call.1} parent=5 // pred_check_branch
        %144 = sbr.rel (%p141) target = $region32
      $region31: #{tpu_custom_call.1} parent=5 // pred_region
        %s145 = ssub.s32 %s12, 1
        %p146 = scmp.lt.s32.totalorder %s17, 1
        %s147 = scalar_select %p146, %s17, 1
        %s148 = smul.addr %s147, 2
        %s149 = smul.addr %s148, 8
        %s150 = scalar_lea.vmem %s0, %s149
        %p151 = pneg %p38
        %p152 = pneg %p35
        %p153 = pneg %p59
        %p154 = pneg %p56
        %p155 = pneg %p80
        %p156 = pneg %p77
        %p157 = pneg %p106
        %p158 = pneg %p103
        %s159 = sand.u32 %s93, 1
        %s160 = scalar_lea.sflag [#allocation3], %s159
        %s161 = sand.u32 %s93, 1
        %s162 = smul.addr %s161, 16
        %s163 = scalar_lea.vmem [#allocation2], %s162
        %p164 = scmp.lt.s32.totalorder %s17, 1
        %s165 = scalar_select %p164, %s17, 1
        %s166 = smul.addr %s165, 2
        %s167 = smul.addr %s166, 8
        %s168 = scalar_lea.vmem %s0, %s167
        %v170 = vld [vmem:[%s168] sm:$0xff]
        %v171 = vld [vmem:[%s168 + $0x8] sm:$0xff]
        %v172 = vlaneseq
        %v173 = vand.u32 %v172, 127
        %v174 = vadd.s32 %v173, 128
        %vm175 = vcmp.lt.s32.totalorder %v173, 0
        %v176 = vsub.s32 0, %v173
        %v177 = vsel %vm175, %v176, %v173
        %v178 = vshrl.u32 %v177, 4
        %v179 = vand.u32 %v177, 15
        %v180 = vsub.s32 0, %v179
        %v181 = vsel %vm175, %v180, %v179
        %vm182 = vcmp.lt.s32.totalorder %v174, 0
        %v183 = vsub.s32 0, %v174
        %v184 = vsel %vm182, %v183, %v174
        %v185 = vshrl.u32 %v184, 4
        %v186 = vand.u32 %v184, 15
        %v187 = vsub.s32 0, %v186
        %v188 = vsel %vm182, %v187, %v186
        %vm189 = vcmp.ne.s32.totalorder %v181, 0
        %vm190 = vcmp.ne.s32.totalorder %v188, 0
        %vm191 = vcmp.lt.s32.totalorder %v181, 0
        %vm192 = vcmp.lt.s32.totalorder %v188, 0
        %vm193 = vmand %vm191, %vm189
        %vm194 = vmand %vm192, %vm190
        %v195 = vadd.s32 %v181, 16
        %v196 = vadd.s32 %v188, 16
        %v197 = vsel %vm193, %v195, %v181
        %v198 = vsel %vm194, %v196, %v188
        %vm199 = vcmp.lt.s32.totalorder %v173, 16
        %vm200 = vcmp.lt.s32.totalorder %v174, 16
        %vm201 = vcmp.ge.s32.totalorder %v173, 240
        %vm202 = vcmp.ge.s32.totalorder %v174, 240
        %vm203 = vcmp.eq.s32.totalorder %v197, 0
        %vm204 = vcmp.eq.s32.totalorder %v198, 0
        %vm205 = vcmp.eq.s32.totalorder %v197, 15
        %vm206 = vcmp.eq.s32.totalorder %v198, 15
        %207 = vrot.lane.b32.xlu0 %v170, 16
        %v208 = vpop.permute.xlu0 %207
        %209 = vrot.lane.b32.xlu0 %v171, 16
        %v210 = vpop.permute.xlu0 %209
        %v211 = vsel %vm199, %v208, %v210
        %v212 = vsel %vm199, %v210, %v208
        %213 = vrot.lane.b32.xlu0 %v170, 112
        %v214 = vpop.permute.xlu0 %213
        %215 = vrot.lane.b32.xlu0 %v171, 112
        %v216 = vpop.permute.xlu0 %215
        %vm217 = vcmp.lt.s32.totalorder %v173, 112
        %v218 = vsel %vm217, %v214, %v216
        %v219 = vsel %vm217, %v216, %v214
        %v220 = vsel %vm199, 1, 0
        %v221 = vsel %vm200, 1, 0
        %vm222 = vcmp.eq.s32.totalorder %v220, 1
        %vm223 = vcmp.eq.s32.totalorder %v221, 1
        %v224 = vsel %vm222, %v218, %v212
        %v225 = vsel %vm223, %v219, %v211
        %v226 = vsel %vm201, 1, 0
        %v227 = vsel %vm202, 1, 0
        %vm228 = vcmp.eq.s32.totalorder %v226, 1
        %vm229 = vcmp.eq.s32.totalorder %v227, 1
        %v230 = vsel %vm228, %v212, %v218
        %v231 = vsel %vm229, %v211, %v219
        %232 = vrot.lane.b32.xlu0 %v224, 1
        %v233 = vpop.permute.xlu0 %232
        %234 = vrot.lane.b32.xlu0 %v225, 1
        %v235 = vpop.permute.xlu0 %234
        %vm236 = vcmp.lt.s32.totalorder %v173, 1
        %v237 = vsel %vm236, %v233, %v235
        %v238 = vsel %vm236, %v235, %v233
        %239 = vrot.lane.b32.xlu0 %v224, 127
        %v240 = vpop.permute.xlu0 %239
        %241 = vrot.lane.b32.xlu0 %v225, 127
        %v242 = vpop.permute.xlu0 %241
        %vm243 = vcmp.lt.s32.totalorder %v173, 127
        %v244 = vsel %vm243, %v240, %v242
        %v245 = vsel %vm243, %v242, %v240
        %v246 = vsel %vm203, 1, 0
        %v247 = vsel %vm204, 1, 0
        %vm248 = vcmp.eq.s32.totalorder %v246, 1
        %vm249 = vcmp.eq.s32.totalorder %v247, 1
        %v250 = vsel %vm248, %v244, %v238
        %v251 = vsel %vm249, %v245, %v237
        %v252 = vsel %vm205, 1, 0
        %v253 = vsel %vm206, 1, 0
        %vm254 = vcmp.eq.s32.totalorder %v252, 1
        %vm255 = vcmp.eq.s32.totalorder %v253, 1
        %v256 = vsel %vm254, %v238, %v244
        %v257 = vsel %vm255, %v237, %v245
        %v258 = vld [vmem:[%s1] sm:$0xf]
        %v259 = vpack.c.bf16 %v250, %v250
        %v260 = vpack.c.bf16 %v251, %v251
        %s261 = scalar_lea.vmem %s1, 4
        %v262 = vld [vmem:[%s261] sm:$0xf]
        %v263 = vpack.c.bf16 %v224, %v224
        %v264 = vpack.c.bf16 %v225, %v225
        %vm265 = vcmask 64512
        %v267 = vsel %vm265, %v262, 0
        %vm269 = vcmask 1043456
        %v271 = vsel %vm269, %v263, 0
        %v274 = vsel %vm269, %v264, 0
        %276 = vmatprep.subr.bf16.mxu0 %v274
        %277 = vmatpush1.bf16.msra.mxu0 %v271
        %278 = vmatprep.subr.bf16.mxu0 0
        %279 = vmatpush1.bf16.msra.mxu0 0
        %280 = vmatprep.subr.bf16.mxu0 0
        %281 = vmatpush1.bf16.msra.mxu0 0
        %282 = vmatprep.subr.bf16.mxu0 0
        %283 = vmatpush1.bf16.msra.mxu0 0
        %284 = vmatprep.subr.bf16.mxu0 0
        %285 = vmatpush1.bf16.msra.mxu0 0
        %286 = vmatprep.subr.bf16.mxu0 0
        %287 = vmatpush1.bf16.msra.mxu0 0
        %288 = vmatprep.subr.bf16.mxu0 0
        %289 = vmatpush1.bf16.msra.mxu0 0
        %290 = vmatprep.subr.bf16.mxu0 0
        %291 = vmatpush1.bf16.msra.mxu0 0
        %292 = vmatprep.subr.bf16.mxu0 0
        %293 = vmatpush1.bf16.msra.mxu0 0
        %294 = vmatprep.subr.bf16.mxu0 0
        %295 = vmatpush1.bf16.msra.mxu0 0
        %296 = vmatprep.subr.bf16.mxu0 0
        %297 = vmatpush1.bf16.msra.mxu0 0
        %298 = vmatprep.subr.bf16.mxu0 0
        %299 = vmatpush1.bf16.msra.mxu0 0
        %300 = vmatprep.subr.bf16.mxu0 0
        %301 = vmatpush1.bf16.msra.mxu0 0
        %302 = vmatprep.subr.bf16.mxu0 0
        %303 = vmatpush1.bf16.msra.mxu0 0
        %304 = vmatprep.subr.bf16.mxu0 0
        %305 = vmatpush1.bf16.msra.mxu0 0
        %306 = vmatprep.subr.bf16.mxu0 0
        %307 = vmatpush1.bf16.msra.mxu0 0
        %308 = vmatprep.mubr.bf16.mxu0 0
        %309 = vmatmul.mubr.bf16.gmra.mrb[0].mxu0 %v267
        %v310 = vpop.f32.mrb[0].mxu0
        %v311 = vadd.f32 0.0, %v310
        %v312 = vpop.f32.mrb[0].mxu0
        %v313 = vadd.f32 0.0, %v312
        %v314 = vpop.f32.mrb[0].mxu0
        %v315 = vpop.f32.mrb[0].mxu0
        %316 = vdwg.mxu0
        %v318 = vsel %vm265, %v258, 0
        %v321 = vsel %vm269, %v259, 0
        %v324 = vsel %vm269, %v260, 0
        %326 = vmatprep.subr.bf16.mxu0 %v324
        %327 = vmatpush1.bf16.msra.mxu0 %v321
        %328 = vmatprep.subr.bf16.mxu0 0
        %329 = vmatpush1.bf16.msra.mxu0 0
        %330 = vmatprep.subr.bf16.mxu0 0
        %331 = vmatpush1.bf16.msra.mxu0 0
        %332 = vmatprep.subr.bf16.mxu0 0
        %333 = vmatpush1.bf16.msra.mxu0 0
        %334 = vmatprep.subr.bf16.mxu0 0
        %335 = vmatpush1.bf16.msra.mxu0 0
        %336 = vmatprep.subr.bf16.mxu0 0
        %337 = vmatpush1.bf16.msra.mxu0 0
        %338 = vmatprep.subr.bf16.mxu0 0
        %339 = vmatpush1.bf16.msra.mxu0 0
        %340 = vmatprep.subr.bf16.mxu0 0
        %341 = vmatpush1.bf16.msra.mxu0 0
        %342 = vmatprep.subr.bf16.mxu0 0
        %343 = vmatpush1.bf16.msra.mxu0 0
        %344 = vmatprep.subr.bf16.mxu0 0
        %345 = vmatpush1.bf16.msra.mxu0 0
        %346 = vmatprep.subr.bf16.mxu0 0
        %347 = vmatpush1.bf16.msra.mxu0 0
        %348 = vmatprep.subr.bf16.mxu0 0
        %349 = vmatpush1.bf16.msra.mxu0 0
        %350 = vmatprep.subr.bf16.mxu0 0
        %351 = vmatpush1.bf16.msra.mxu0 0
        %352 = vmatprep.subr.bf16.mxu0 0
        %353 = vmatpush1.bf16.msra.mxu0 0
        %354 = vmatprep.subr.bf16.mxu0 0
        %355 = vmatpush1.bf16.msra.mxu0 0
        %356 = vmatprep.subr.bf16.mxu0 0
        %357 = vmatpush1.bf16.msra.mxu0 0
        %358 = vmatprep.mubr.bf16.mxu0 0
        %359 = vmatmul.mubr.bf16.gmra.mrb[0].mxu0 %v318
        %v360 = vpop.f32.mrb[0].mxu0
        %v361 = vadd.f32 %v311, %v360
        %v362 = vpop.f32.mrb[0].mxu0
        %v363 = vadd.f32 %v313, %v362
        %v364 = vpop.f32.mrb[0].mxu0
        %v365 = vpop.f32.mrb[0].mxu0
        %366 = vdwg.mxu0
        %s367 = scalar_lea.vmem %s1, 8
        %v368 = vld [vmem:[%s367] sm:$0xf]
        %v369 = vpack.c.bf16 %v256, %v256
        %v370 = vpack.c.bf16 %v257, %v257
        %v372 = vsel %vm265, %v368, 0
        %v375 = vsel %vm269, %v369, 0
        %v378 = vsel %vm269, %v370, 0
        %380 = vmatprep.subr.bf16.mxu0 %v378
        %381 = vmatpush1.bf16.msra.mxu0 %v375
        %382 = vmatprep.subr.bf16.mxu0 0
        %383 = vmatpush1.bf16.msra.mxu0 0
        %384 = vmatprep.subr.bf16.mxu0 0
        %385 = vmatpush1.bf16.msra.mxu0 0
        %386 = vmatprep.subr.bf16.mxu0 0
        %387 = vmatpush1.bf16.msra.mxu0 0
        %388 = vmatprep.subr.bf16.mxu0 0
        %389 = vmatpush1.bf16.msra.mxu0 0
        %390 = vmatprep.subr.bf16.mxu0 0
        %391 = vmatpush1.bf16.msra.mxu0 0
        %392 = vmatprep.subr.bf16.mxu0 0
        %393 = vmatpush1.bf16.msra.mxu0 0
        %394 = vmatprep.subr.bf16.mxu0 0
        %395 = vmatpush1.bf16.msra.mxu0 0
        %396 = vmatprep.subr.bf16.mxu0 0
        %397 = vmatpush1.bf16.msra.mxu0 0
        %398 = vmatprep.subr.bf16.mxu0 0
        %399 = vmatpush1.bf16.msra.mxu0 0
        %400 = vmatprep.subr.bf16.mxu0 0
        %401 = vmatpush1.bf16.msra.mxu0 0
        %402 = vmatprep.subr.bf16.mxu0 0
        %403 = vmatpush1.bf16.msra.mxu0 0
        %404 = vmatprep.subr.bf16.mxu0 0
        %405 = vmatpush1.bf16.msra.mxu0 0
        %406 = vmatprep.subr.bf16.mxu0 0
        %407 = vmatpush1.bf16.msra.mxu0 0
        %408 = vmatprep.subr.bf16.mxu0 0
        %409 = vmatpush1.bf16.msra.mxu0 0
        %410 = vmatprep.subr.bf16.mxu0 0
        %411 = vmatpush1.bf16.msra.mxu0 0
        %412 = vmatprep.mubr.bf16.mxu0 0
        %413 = vmatmul.mubr.bf16.gmra.mrb[0].mxu0 %v372
        %v414 = vpop.f32.mrb[0].mxu0
        %v415 = vadd.f32 0.0, %v414
        %v416 = vpop.f32.mrb[0].mxu0
        %v417 = vadd.f32 0.0, %v416
        %v418 = vpop.f32.mrb[0].mxu0
        %v419 = vpop.f32.mrb[0].mxu0
        %420 = vdwg.mxu0
        %v421 = vadd.f32 %v361, %v415
        %v422 = vadd.f32 %v363, %v417
        %423 = vrot.lane.b32.xlu0 %v170, 1
        %v424 = vpop.permute.xlu0 %423
        %425 = vrot.lane.b32.xlu0 %v171, 1
        %v426 = vpop.permute.xlu0 %425
        %v427 = vsel %vm236, %v424, %v426
        %v428 = vsel %vm236, %v426, %v424
        %429 = vrot.lane.b32.xlu0 %v170, 127
        %v430 = vpop.permute.xlu0 %429
        %431 = vrot.lane.b32.xlu0 %v171, 127
        %v432 = vpop.permute.xlu0 %431
        %v433 = vsel %vm243, %v430, %v432
        %v434 = vsel %vm243, %v432, %v430
        %v435 = vsel %vm248, %v433, %v428
        %v436 = vsel %vm249, %v434, %v427
        %v437 = vsel %vm254, %v428, %v433
        %v438 = vsel %vm255, %v427, %v434
        %s439 = scalar_lea.vmem %s1, 12
        %v440 = vld [vmem:[%s439] sm:$0xf]
        %v441 = vpack.c.bf16 %v435, %v435
        %v442 = vpack.c.bf16 %v436, %v436
        %v444 = vsel %vm265, %v440, 0
        %v447 = vsel %vm269, %v441, 0
        %v450 = vsel %vm269, %v442, 0
        %452 = vmatprep.subr.bf16.mxu0 %v450
        %453 = vmatpush1.bf16.msra.mxu0 %v447
        %454 = vmatprep.subr.bf16.mxu0 0
        %455 = vmatpush1.bf16.msra.mxu0 0
        %456 = vmatprep.subr.bf16.mxu0 0
        %457 = vmatpush1.bf16.msra.mxu0 0
        %458 = vmatprep.subr.bf16.mxu0 0
        %459 = vmatpush1.bf16.msra.mxu0 0
        %460 = vmatprep.subr.bf16.mxu0 0
        %461 = vmatpush1.bf16.msra.mxu0 0
        %462 = vmatprep.subr.bf16.mxu0 0
        %463 = vmatpush1.bf16.msra.mxu0 0
        %464 = vmatprep.subr.bf16.mxu0 0
        %465 = vmatpush1.bf16.msra.mxu0 0
        %466 = vmatprep.subr.bf16.mxu0 0
        %467 = vmatpush1.bf16.msra.mxu0 0
        %468 = vmatprep.subr.bf16.mxu0 0
        %469 = vmatpush1.bf16.msra.mxu0 0
        %470 = vmatprep.subr.bf16.mxu0 0
        %471 = vmatpush1.bf16.msra.mxu0 0
        %472 = vmatprep.subr.bf16.mxu0 0
        %473 = vmatpush1.bf16.msra.mxu0 0
        %474 = vmatprep.subr.bf16.mxu0 0
        %475 = vmatpush1.bf16.msra.mxu0 0
        %476 = vmatprep.subr.bf16.mxu0 0
        %477 = vmatpush1.bf16.msra.mxu0 0
        %478 = vmatprep.subr.bf16.mxu0 0
        %479 = vmatpush1.bf16.msra.mxu0 0
        %480 = vmatprep.subr.bf16.mxu0 0
        %481 = vmatpush1.bf16.msra.mxu0 0
        %482 = vmatprep.subr.bf16.mxu0 0
        %483 = vmatpush1.bf16.msra.mxu0 0
        %484 = vmatprep.mubr.bf16.mxu0 0
        %485 = vmatmul.mubr.bf16.gmra.mrb[0].mxu0 %v444
        %v486 = vpop.f32.mrb[0].mxu0
        %v487 = vadd.f32 0.0, %v486
        %v488 = vpop.f32.mrb[0].mxu0
        %v489 = vadd.f32 0.0, %v488
        %v490 = vpop.f32.mrb[0].mxu0
        %v491 = vpop.f32.mrb[0].mxu0
        %492 = vdwg.mxu0
        %v493 = vadd.f32 %v421, %v487
        %v494 = vadd.f32 %v422, %v489
        %s495 = scalar_lea.vmem %s1, 16
        %v496 = vld [vmem:[%s495] sm:$0xf]
        %v497 = vpack.c.bf16 %v170, %v170
        %v498 = vpack.c.bf16 %v171, %v171
        %v500 = vsel %vm265, %v496, 0
        %v503 = vsel %vm269, %v497, 0
        %v506 = vsel %vm269, %v498, 0
        %508 = vmatprep.subr.bf16.mxu0 %v506
        %509 = vmatpush1.bf16.msra.mxu0 %v503
        %510 = vmatprep.subr.bf16.mxu0 0
        %511 = vmatpush1.bf16.msra.mxu0 0
        %512 = vmatprep.subr.bf16.mxu0 0
        %513 = vmatpush1.bf16.msra.mxu0 0
        %514 = vmatprep.subr.bf16.mxu0 0
        %515 = vmatpush1.bf16.msra.mxu0 0
        %516 = vmatprep.subr.bf16.mxu0 0
        %517 = vmatpush1.bf16.msra.mxu0 0
        %518 = vmatprep.subr.bf16.mxu0 0
        %519 = vmatpush1.bf16.msra.mxu0 0
        %520 = vmatprep.subr.bf16.mxu0 0
        %521 = vmatpush1.bf16.msra.mxu0 0
        %522 = vmatprep.subr.bf16.mxu0 0
        %523 = vmatpush1.bf16.msra.mxu0 0
        %524 = vmatprep.subr.bf16.mxu0 0
        %525 = vmatpush1.bf16.msra.mxu0 0
        %526 = vmatprep.subr.bf16.mxu0 0
        %527 = vmatpush1.bf16.msra.mxu0 0
        %528 = vmatprep.subr.bf16.mxu0 0
        %529 = vmatpush1.bf16.msra.mxu0 0
        %530 = vmatprep.subr.bf16.mxu0 0
        %531 = vmatpush1.bf16.msra.mxu0 0
        %532 = vmatprep.subr.bf16.mxu0 0
        %533 = vmatpush1.bf16.msra.mxu0 0
        %534 = vmatprep.subr.bf16.mxu0 0
        %535 = vmatpush1.bf16.msra.mxu0 0
        %536 = vmatprep.subr.bf16.mxu0 0
        %537 = vmatpush1.bf16.msra.mxu0 0
        %538 = vmatprep.subr.bf16.mxu0 0
        %539 = vmatpush1.bf16.msra.mxu0 0
        %540 = vmatprep.mubr.bf16.mxu0 0
        %541 = vmatmul.mubr.bf16.gmra.mrb[0].mxu0 %v500
        %v542 = vpop.f32.mrb[0].mxu0
        %v543 = vadd.f32 0.0, %v542
        %v544 = vpop.f32.mrb[0].mxu0
        %v545 = vadd.f32 0.0, %v544
        %v546 = vpop.f32.mrb[0].mxu0
        %v547 = vpop.f32.mrb[0].mxu0
        %548 = vdwg.mxu0
        %v549 = vadd.f32 %v493, %v543
        %v550 = vadd.f32 %v494, %v545
        %s551 = scalar_lea.vmem %s1, 20
        %v552 = vld [vmem:[%s551] sm:$0xf]
        %v553 = vpack.c.bf16 %v437, %v437
        %v554 = vpack.c.bf16 %v438, %v438
        %v556 = vsel %vm265, %v552, 0
        %v559 = vsel %vm269, %v553, 0
        %v562 = vsel %vm269, %v554, 0
        %564 = vmatprep.subr.bf16.mxu0 %v562
        %565 = vmatpush1.bf16.msra.mxu0 %v559
        %566 = vmatprep.subr.bf16.mxu0 0
        %567 = vmatpush1.bf16.msra.mxu0 0
        %568 = vmatprep.subr.bf16.mxu0 0
        %569 = vmatpush1.bf16.msra.mxu0 0
        %570 = vmatprep.subr.bf16.mxu0 0
        %571 = vmatpush1.bf16.msra.mxu0 0
        %572 = vmatprep.subr.bf16.mxu0 0
        %573 = vmatpush1.bf16.msra.mxu0 0
        %574 = vmatprep.subr.bf16.mxu0 0
        %575 = vmatpush1.bf16.msra.mxu0 0
        %576 = vmatprep.subr.bf16.mxu0 0
        %577 = vmatpush1.bf16.msra.mxu0 0
        %578 = vmatprep.subr.bf16.mxu0 0
        %579 = vmatpush1.bf16.msra.mxu0 0
        %580 = vmatprep.subr.bf16.mxu0 0
        %581 = vmatpush1.bf16.msra.mxu0 0
        %582 = vmatprep.subr.bf16.mxu0 0
        %583 = vmatpush1.bf16.msra.mxu0 0
        %584 = vmatprep.subr.bf16.mxu0 0
        %585 = vmatpush1.bf16.msra.mxu0 0
        %586 = vmatprep.subr.bf16.mxu0 0
        %587 = vmatpush1.bf16.msra.mxu0 0
        %588 = vmatprep.subr.bf16.mxu0 0
        %589 = vmatpush1.bf16.msra.mxu0 0
        %590 = vmatprep.subr.bf16.mxu0 0
        %591 = vmatpush1.bf16.msra.mxu0 0
        %592 = vmatprep.subr.bf16.mxu0 0
        %593 = vmatpush1.bf16.msra.mxu0 0
        %594 = vmatprep.subr.bf16.mxu0 0
        %595 = vmatpush1.bf16.msra.mxu0 0
        %596 = vmatprep.mubr.bf16.mxu0 0
        %597 = vmatmul.mubr.bf16.gmra.mrb[0].mxu0 %v556
        %v598 = vpop.f32.mrb[0].mxu0
        %v599 = vadd.f32 0.0, %v598
        %v600 = vpop.f32.mrb[0].mxu0
        %v601 = vadd.f32 0.0, %v600
        %v602 = vpop.f32.mrb[0].mxu0
        %v603 = vpop.f32.mrb[0].mxu0
        %604 = vdwg.mxu0
        %v605 = vadd.f32 %v549, %v599
        %v606 = vadd.f32 %v550, %v601
        %607 = vrot.lane.b32.xlu0 %v230, 1
        %v608 = vpop.permute.xlu0 %607
        %609 = vrot.lane.b32.xlu0 %v231, 1
        %v610 = vpop.permute.xlu0 %609
        %v611 = vsel %vm236, %v608, %v610
        %v612 = vsel %vm236, %v610, %v608
        %613 = vrot.lane.b32.xlu0 %v230, 127
        %v614 = vpop.permute.xlu0 %613
        %615 = vrot.lane.b32.xlu0 %v231, 127
        %v616 = vpop.permute.xlu0 %615
        %v617 = vsel %vm243, %v614, %v616
        %v618 = vsel %vm243, %v616, %v614
        %v619 = vsel %vm248, %v617, %v612
        %v620 = vsel %vm249, %v618, %v611
        %v621 = vsel %vm254, %v612, %v617
        %v622 = vsel %vm255, %v611, %v618
        %s623 = scalar_lea.vmem %s1, 24
        %v624 = vld [vmem:[%s623] sm:$0xf]
        %v625 = vpack.c.bf16 %v619, %v619
        %v626 = vpack.c.bf16 %v620, %v620
        %v628 = vsel %vm265, %v624, 0
        %v631 = vsel %vm269, %v625, 0
        %v634 = vsel %vm269, %v626, 0
        %636 = vmatprep.subr.bf16.mxu0 %v634
        %637 = vmatpush1.bf16.msra.mxu0 %v631
        %638 = vmatprep.subr.bf16.mxu0 0
        %639 = vmatpush1.bf16.msra.mxu0 0
        %640 = vmatprep.subr.bf16.mxu0 0
        %641 = vmatpush1.bf16.msra.mxu0 0
        %642 = vmatprep.subr.bf16.mxu0 0
        %643 = vmatpush1.bf16.msra.mxu0 0
        %644 = vmatprep.subr.bf16.mxu0 0
        %645 = vmatpush1.bf16.msra.mxu0 0
        %646 = vmatprep.subr.bf16.mxu0 0
        %647 = vmatpush1.bf16.msra.mxu0 0
        %648 = vmatprep.subr.bf16.mxu0 0
        %649 = vmatpush1.bf16.msra.mxu0 0
        %650 = vmatprep.subr.bf16.mxu0 0
        %651 = vmatpush1.bf16.msra.mxu0 0
        %652 = vmatprep.subr.bf16.mxu0 0
        %653 = vmatpush1.bf16.msra.mxu0 0
        %654 = vmatprep.subr.bf16.mxu0 0
        %655 = vmatpush1.bf16.msra.mxu0 0
        %656 = vmatprep.subr.bf16.mxu0 0
        %657 = vmatpush1.bf16.msra.mxu0 0
        %658 = vmatprep.subr.bf16.mxu0 0
        %659 = vmatpush1.bf16.msra.mxu0 0
        %660 = vmatprep.subr.bf16.mxu0 0
        %661 = vmatpush1.bf16.msra.mxu0 0
        %662 = vmatprep.subr.bf16.mxu0 0
        %663 = vmatpush1.bf16.msra.mxu0 0
        %664 = vmatprep.subr.bf16.mxu0 0
        %665 = vmatpush1.bf16.msra.mxu0 0
        %666 = vmatprep.subr.bf16.mxu0 0
        %667 = vmatpush1.bf16.msra.mxu0 0
        %668 = vmatprep.mubr.bf16.mxu0 0
        %669 = vmatmul.mubr.bf16.gmra.mrb[0].mxu0 %v628
        %v670 = vpop.f32.mrb[0].mxu0
        %v671 = vadd.f32 0.0, %v670
        %v672 = vpop.f32.mrb[0].mxu0
        %v673 = vadd.f32 0.0, %v672
        %v674 = vpop.f32.mrb[0].mxu0
        %v675 = vpop.f32.mrb[0].mxu0
        %676 = vdwg.mxu0
        %v677 = vadd.f32 %v605, %v671
        %v678 = vadd.f32 %v606, %v673
        %s679 = scalar_lea.vmem %s1, 28
        %v680 = vld [vmem:[%s679] sm:$0xf]
        %v681 = vpack.c.bf16 %v230, %v230
        %v682 = vpack.c.bf16 %v231, %v231
        %v684 = vsel %vm265, %v680, 0
        %v687 = vsel %vm269, %v681, 0
        %v690 = vsel %vm269, %v682, 0
        %692 = vmatprep.subr.bf16.mxu0 %v690
        %693 = vmatpush1.bf16.msra.mxu0 %v687
        %694 = vmatprep.subr.bf16.mxu0 0
        %695 = vmatpush1.bf16.msra.mxu0 0
        %696 = vmatprep.subr.bf16.mxu0 0
        %697 = vmatpush1.bf16.msra.mxu0 0
        %698 = vmatprep.subr.bf16.mxu0 0
        %699 = vmatpush1.bf16.msra.mxu0 0
        %700 = vmatprep.subr.bf16.mxu0 0
        %701 = vmatpush1.bf16.msra.mxu0 0
        %702 = vmatprep.subr.bf16.mxu0 0
        %703 = vmatpush1.bf16.msra.mxu0 0
        %704 = vmatprep.subr.bf16.mxu0 0
        %705 = vmatpush1.bf16.msra.mxu0 0
        %706 = vmatprep.subr.bf16.mxu0 0
        %707 = vmatpush1.bf16.msra.mxu0 0
        %708 = vmatprep.subr.bf16.mxu0 0
        %709 = vmatpush1.bf16.msra.mxu0 0
        %710 = vmatprep.subr.bf16.mxu0 0
        %711 = vmatpush1.bf16.msra.mxu0 0
        %712 = vmatprep.subr.bf16.mxu0 0
        %713 = vmatpush1.bf16.msra.mxu0 0
        %714 = vmatprep.subr.bf16.mxu0 0
        %715 = vmatpush1.bf16.msra.mxu0 0
        %716 = vmatprep.subr.bf16.mxu0 0
        %717 = vmatpush1.bf16.msra.mxu0 0
        %718 = vmatprep.subr.bf16.mxu0 0
        %719 = vmatpush1.bf16.msra.mxu0 0
        %720 = vmatprep.subr.bf16.mxu0 0
        %721 = vmatpush1.bf16.msra.mxu0 0
        %722 = vmatprep.subr.bf16.mxu0 0
        %723 = vmatpush1.bf16.msra.mxu0 0
        %724 = vmatprep.mubr.bf16.mxu0 0
        %725 = vmatmul.mubr.bf16.gmra.mrb[0].mxu0 %v684
        %v726 = vpop.f32.mrb[0].mxu0
        %v727 = vadd.f32 0.0, %v726
        %v728 = vpop.f32.mrb[0].mxu0
        %v729 = vadd.f32 0.0, %v728
        %v730 = vpop.f32.mrb[0].mxu0
        %v731 = vpop.f32.mrb[0].mxu0
        %732 = vdwg.mxu0
        %v733 = vadd.f32 %v677, %v727
        %v734 = vadd.f32 %v678, %v729
        %s735 = scalar_lea.vmem %s1, 32
        %v736 = vld [vmem:[%s735] sm:$0xf]
        %v737 = vpack.c.bf16 %v621, %v621
        %v738 = vpack.c.bf16 %v622, %v622
        %v740 = vsel %vm265, %v736, 0
        %v743 = vsel %vm269, %v737, 0
        %v746 = vsel %vm269, %v738, 0
        %748 = vmatprep.subr.bf16.mxu0 %v746
        %749 = vmatpush1.bf16.msra.mxu0 %v743
        %750 = vmatprep.subr.bf16.mxu0 0
        %751 = vmatpush1.bf16.msra.mxu0 0
        %752 = vmatprep.subr.bf16.mxu0 0
        %753 = vmatpush1.bf16.msra.mxu0 0
        %754 = vmatprep.subr.bf16.mxu0 0
        %755 = vmatpush1.bf16.msra.mxu0 0
        %756 = vmatprep.subr.bf16.mxu0 0
        %757 = vmatpush1.bf16.msra.mxu0 0
        %758 = vmatprep.subr.bf16.mxu0 0
        %759 = vmatpush1.bf16.msra.mxu0 0
        %760 = vmatprep.subr.bf16.mxu0 0
        %761 = vmatpush1.bf16.msra.mxu0 0
        %762 = vmatprep.subr.bf16.mxu0 0
        %763 = vmatpush1.bf16.msra.mxu0 0
        %764 = vmatprep.subr.bf16.mxu0 0
        %765 = vmatpush1.bf16.msra.mxu0 0
        %766 = vmatprep.subr.bf16.mxu0 0
        %767 = vmatpush1.bf16.msra.mxu0 0
        %768 = vmatprep.subr.bf16.mxu0 0
        %769 = vmatpush1.bf16.msra.mxu0 0
        %770 = vmatprep.subr.bf16.mxu0 0
        %771 = vmatpush1.bf16.msra.mxu0 0
        %772 = vmatprep.subr.bf16.mxu0 0
        %773 = vmatpush1.bf16.msra.mxu0 0
        %774 = vmatprep.subr.bf16.mxu0 0
        %775 = vmatpush1.bf16.msra.mxu0 0
        %776 = vmatprep.subr.bf16.mxu0 0
        %777 = vmatpush1.bf16.msra.mxu0 0
        %778 = vmatprep.subr.bf16.mxu0 0
        %779 = vmatpush1.bf16.msra.mxu0 0
        %780 = vmatprep.mubr.bf16.mxu0 0
        %781 = vmatmul.mubr.bf16.gmra.mrb[0].mxu0 %v740
        %v782 = vpop.f32.mrb[0].mxu0
        %v783 = vadd.f32 0.0, %v782
        %v784 = vpop.f32.mrb[0].mxu0
        %v785 = vadd.f32 0.0, %v784
        %v786 = vpop.f32.mrb[0].mxu0
        %v787 = vpop.f32.mrb[0].mxu0
        %788 = vdwg.mxu0
        %v789 = vadd.f32 %v733, %v783
        %v790 = vadd.f32 %v734, %v785
        %v791 = vadd.f32 %v789, %v790
        %792 = vadd.xlane.f32.xlu0 %v791
        %v793 = vpop.xlane.xlu0 %792
        %v794 = vmul.f32 %v789, %v789
        %v795 = vmul.f32 %v790, %v790
        %v796 = vadd.f32 %v794, %v795
        %797 = vadd.xlane.f32.xlu0 %v796
        %v798 = vpop.xlane.xlu0 %797
        %v799 = vmul.f32 %v793, 0.00390625
        %v800 = vmul.f32 %v798, 0.00390625
        %v801 = vmul.f32 %v799, %v799
        %v802 = vsub.f32 %v800, %v801
        %v803 = vmax.f32 %v802, 0.0
        %v804 = vsub.f32 %v789, %v799
        %v805 = vsub.f32 %v790, %v799
        %v806 = vadd.f32 %v803, 1e-05
        %v807 = vrsqrt.pop %v806
        %v808 = vmul.f32 %v804, %v807
        %v809 = vmul.f32 %v805, %v807
        %v810 = vmax.f32 %v808, 0.0
        %v811 = vmax.f32 %v809, 0.0
        %812 = vrot.lane.b32.xlu0 %v810, 16
        %v813 = vpop.permute.xlu0 %812
        %814 = vrot.lane.b32.xlu0 %v811, 16
        %v815 = vpop.permute.xlu0 %814
        %v816 = vsel %vm199, %v813, %v815
        %v817 = vsel %vm199, %v815, %v813
        %818 = vrot.lane.b32.xlu0 %v810, 112
        %v819 = vpop.permute.xlu0 %818
        %820 = vrot.lane.b32.xlu0 %v811, 112
        %v821 = vpop.permute.xlu0 %820
        %v822 = vsel %vm217, %v819, %v821
        %v823 = vsel %vm217, %v821, %v819
        %v824 = vsel %vm222, %v822, %v817
        %v825 = vsel %vm223, %v823, %v816
        %v826 = vsel %vm228, %v817, %v822
        %v827 = vsel %vm229, %v816, %v823
        %828 = vrot.lane.b32.xlu0 %v824, 1
        %v829 = vpop.permute.xlu0 %828
        %830 = vrot.lane.b32.xlu0 %v825, 1
        %v831 = vpop.permute.xlu0 %830
        %v832 = vsel %vm236, %v829, %v831
        %v833 = vsel %vm236, %v831, %v829
        %834 = vrot.lane.b32.xlu0 %v824, 127
        %v835 = vpop.permute.xlu0 %834
        %836 = vrot.lane.b32.xlu0 %v825, 127
        %v837 = vpop.permute.xlu0 %836
        %v838 = vsel %vm243, %v835, %v837
        %v839 = vsel %vm243, %v837, %v835
        %v840 = vsel %vm248, %v838, %v833
        %v841 = vsel %vm249, %v839, %v832
        %v842 = vsel %vm254, %v833, %v838
        %v843 = vsel %vm255, %v832, %v839
        %v844 = vld [vmem:[%s2] sm:$0xf]
        %v845 = vpack.c.bf16 %v840, %v840
        %v846 = vpack.c.bf16 %v841, %v841
        %s847 = scalar_lea.vmem %s2, 4
        %v848 = vld [vmem:[%s847] sm:$0xf]
        %v849 = vpack.c.bf16 %v824, %v824
        %v850 = vpack.c.bf16 %v825, %v825
        %v852 = vsel %vm265, %v848, 0
        %v855 = vsel %vm269, %v849, 0
        %v858 = vsel %vm269, %v850, 0
        %860 = vmatprep.subr.bf16.mxu0 %v858
        %861 = vmatpush1.bf16.msra.mxu0 %v855
        %862 = vmatprep.subr.bf16.mxu0 0
        %863 = vmatpush1.bf16.msra.mxu0 0
        %864 = vmatprep.subr.bf16.mxu0 0
        %865 = vmatpush1.bf16.msra.mxu0 0
        %866 = vmatprep.subr.bf16.mxu0 0
        %867 = vmatpush1.bf16.msra.mxu0 0
        %868 = vmatprep.subr.bf16.mxu0 0
        %869 = vmatpush1.bf16.msra.mxu0 0
        %870 = vmatprep.subr.bf16.mxu0 0
        %871 = vmatpush1.bf16.msra.mxu0 0
        %872 = vmatprep.subr.bf16.mxu0 0
        %873 = vmatpush1.bf16.msra.mxu0 0
        %874 = vmatprep.subr.bf16.mxu0 0
        %875 = vmatpush1.bf16.msra.mxu0 0
        %876 = vmatprep.subr.bf16.mxu0 0
        %877 = vmatpush1.bf16.msra.mxu0 0
        %878 = vmatprep.subr.bf16.mxu0 0
        %879 = vmatpush1.bf16.msra.mxu0 0
        %880 = vmatprep.subr.bf16.mxu0 0
        %881 = vmatpush1.bf16.msra.mxu0 0
        %882 = vmatprep.subr.bf16.mxu0 0
        %883 = vmatpush1.bf16.msra.mxu0 0
        %884 = vmatprep.subr.bf16.mxu0 0
        %885 = vmatpush1.bf16.msra.mxu0 0
        %886 = vmatprep.subr.bf16.mxu0 0
        %887 = vmatpush1.bf16.msra.mxu0 0
        %888 = vmatprep.subr.bf16.mxu0 0
        %889 = vmatpush1.bf16.msra.mxu0 0
        %890 = vmatprep.subr.bf16.mxu0 0
        %891 = vmatpush1.bf16.msra.mxu0 0
        %892 = vmatprep.mubr.bf16.mxu0 0
        %893 = vmatmul.mubr.bf16.gmra.mrb[0].mxu0 %v852
        %v894 = vpop.f32.mrb[0].mxu0
        %v895 = vadd.f32 0.0, %v894
        %v896 = vpop.f32.mrb[0].mxu0
        %v897 = vadd.f32 0.0, %v896
        %v898 = vpop.f32.mrb[0].mxu0
        %v899 = vpop.f32.mrb[0].mxu0
        %900 = vdwg.mxu0
        %v902 = vsel %vm265, %v844, 0
        %v905 = vsel %vm269, %v845, 0
        %v908 = vsel %vm269, %v846, 0
        %910 = vmatprep.subr.bf16.mxu0 %v908
        %911 = vmatpush1.bf16.msra.mxu0 %v905
        %912 = vmatprep.subr.bf16.mxu0 0
        %913 = vmatpush1.bf16.msra.mxu0 0
        %914 = vmatprep.subr.bf16.mxu0 0
        %915 = vmatpush1.bf16.msra.mxu0 0
        %916 = vmatprep.subr.bf16.mxu0 0
        %917 = vmatpush1.bf16.msra.mxu0 0
        %918 = vmatprep.subr.bf16.mxu0 0
        %919 = vmatpush1.bf16.msra.mxu0 0
        %920 = vmatprep.subr.bf16.mxu0 0
        %921 = vmatpush1.bf16.msra.mxu0 0
        %922 = vmatprep.subr.bf16.mxu0 0
        %923 = vmatpush1.bf16.msra.mxu0 0
        %924 = vmatprep.subr.bf16.mxu0 0
        %925 = vmatpush1.bf16.msra.mxu0 0
        %926 = vmatprep.subr.bf16.mxu0 0
        %927 = vmatpush1.bf16.msra.mxu0 0
        %928 = vmatprep.subr.bf16.mxu0 0
        %929 = vmatpush1.bf16.msra.mxu0 0
        %930 = vmatprep.subr.bf16.mxu0 0
        %931 = vmatpush1.bf16.msra.mxu0 0
        %932 = vmatprep.subr.bf16.mxu0 0
        %933 = vmatpush1.bf16.msra.mxu0 0
        %934 = vmatprep.subr.bf16.mxu0 0
        %935 = vmatpush1.bf16.msra.mxu0 0
        %936 = vmatprep.subr.bf16.mxu0 0
        %937 = vmatpush1.bf16.msra.mxu0 0
        %938 = vmatprep.subr.bf16.mxu0 0
        %939 = vmatpush1.bf16.msra.mxu0 0
        %940 = vmatprep.subr.bf16.mxu0 0
        %941 = vmatpush1.bf16.msra.mxu0 0
        %942 = vmatprep.mubr.bf16.mxu0 0
        %943 = vmatmul.mubr.bf16.gmra.mrb[0].mxu0 %v902
        %v944 = vpop.f32.mrb[0].mxu0
        %v945 = vadd.f32 %v895, %v944
        %v946 = vpop.f32.mrb[0].mxu0
        %v947 = vadd.f32 %v897, %v946
        %v948 = vpop.f32.mrb[0].mxu0
        %v949 = vpop.f32.mrb[0].mxu0
        %950 = vdwg.mxu0
        %s951 = scalar_lea.vmem %s2, 8
        %v952 = vld [vmem:[%s951] sm:$0xf]
        %v953 = vpack.c.bf16 %v842, %v842
        %v954 = vpack.c.bf16 %v843, %v843
        %v956 = vsel %vm265, %v952, 0
        %v959 = vsel %vm269, %v953, 0
        %v962 = vsel %vm269, %v954, 0
        %964 = vmatprep.subr.bf16.mxu0 %v962
        %965 = vmatpush1.bf16.msra.mxu0 %v959
        %966 = vmatprep.subr.bf16.mxu0 0
        %967 = vmatpush1.bf16.msra.mxu0 0
        %968 = vmatprep.subr.bf16.mxu0 0
        %969 = vmatpush1.bf16.msra.mxu0 0
        %970 = vmatprep.subr.bf16.mxu0 0
        %971 = vmatpush1.bf16.msra.mxu0 0
        %972 = vmatprep.subr.bf16.mxu0 0
        %973 = vmatpush1.bf16.msra.mxu0 0
        %974 = vmatprep.subr.bf16.mxu0 0
        %975 = vmatpush1.bf16.msra.mxu0 0
        %976 = vmatprep.subr.bf16.mxu0 0
        %977 = vmatpush1.bf16.msra.mxu0 0
        %978 = vmatprep.subr.bf16.mxu0 0
        %979 = vmatpush1.bf16.msra.mxu0 0
        %980 = vmatprep.subr.bf16.mxu0 0
        %981 = vmatpush1.bf16.msra.mxu0 0
        %982 = vmatprep.subr.bf16.mxu0 0
        %983 = vmatpush1.bf16.msra.mxu0 0
        %984 = vmatprep.subr.bf16.mxu0 0
        %985 = vmatpush1.bf16.msra.mxu0 0
        %986 = vmatprep.subr.bf16.mxu0 0
        %987 = vmatpush1.bf16.msra.mxu0 0
        %988 = vmatprep.subr.bf16.mxu0 0
        %989 = vmatpush1.bf16.msra.mxu0 0
        %990 = vmatprep.subr.bf16.mxu0 0
        %991 = vmatpush1.bf16.msra.mxu0 0
        %992 = vmatprep.subr.bf16.mxu0 0
        %993 = vmatpush1.bf16.msra.mxu0 0
        %994 = vmatprep.subr.bf16.mxu0 0
        %995 = vmatpush1.bf16.msra.mxu0 0
        %996 = vmatprep.mubr.bf16.mxu0 0
        %997 = vmatmul.mubr.bf16.gmra.mrb[0].mxu0 %v956
        %v998 = vpop.f32.mrb[0].mxu0
        %v999 = vadd.f32 0.0, %v998
        %v1000 = vpop.f32.mrb[0].mxu0
        %v1001 = vadd.f32 0.0, %v1000
        %v1002 = vpop.f32.mrb[0].mxu0
        %v1003 = vpop.f32.mrb[0].mxu0
        %1004 = vdwg.mxu0
        %v1005 = vadd.f32 %v945, %v999
        %v1006 = vadd.f32 %v947, %v1001
        %1007 = vrot.lane.b32.xlu0 %v810, 1
        %v1008 = vpop.permute.xlu0 %1007
        %1009 = vrot.lane.b32.xlu0 %v811, 1
        %v1010 = vpop.permute.xlu0 %1009
        %v1011 = vsel %vm236, %v1008, %v1010
        %v1012 = vsel %vm236, %v1010, %v1008
        %1013 = vrot.lane.b32.xlu0 %v810, 127
        %v1014 = vpop.permute.xlu0 %1013
        %1015 = vrot.lane.b32.xlu0 %v811, 127
        %v1016 = vpop.permute.xlu0 %1015
        %v1017 = vsel %vm243, %v1014, %v1016
        %v1018 = vsel %vm243, %v1016, %v1014
        %v1019 = vsel %vm248, %v1017, %v1012
        %v1020 = vsel %vm249, %v1018, %v1011
        %v1021 = vsel %vm254, %v1012, %v1017
        %v1022 = vsel %vm255, %v1011, %v1018
        %s1023 = scalar_lea.vmem %s2, 12
        %v1024 = vld [vmem:[%s1023] sm:$0xf]
        %v1025 = vpack.c.bf16 %v1019, %v1019
        %v1026 = vpack.c.bf16 %v1020, %v1020
        %v1028 = vsel %vm265, %v1024, 0
        %v1031 = vsel %vm269, %v1025, 0
        %v1034 = vsel %vm269, %v1026, 0
        %1036 = vmatprep.subr.bf16.mxu0 %v1034
        %1037 = vmatpush1.bf16.msra.mxu0 %v1031
        %1038 = vmatprep.subr.bf16.mxu0 0
        %1039 = vmatpush1.bf16.msra.mxu0 0
        %1040 = vmatprep.subr.bf16.mxu0 0
        %1041 = vmatpush1.bf16.msra.mxu0 0
        %1042 = vmatprep.subr.bf16.mxu0 0
        %1043 = vmatpush1.bf16.msra.mxu0 0
        %1044 = vmatprep.subr.bf16.mxu0 0
        %1045 = vmatpush1.bf16.msra.mxu0 0
        %1046 = vmatprep.subr.bf16.mxu0 0
        %1047 = vmatpush1.bf16.msra.mxu0 0
        %1048 = vmatprep.subr.bf16.mxu0 0
        %1049 = vmatpush1.bf16.msra.mxu0 0
        %1050 = vmatprep.subr.bf16.mxu0 0
        %1051 = vmatpush1.bf16.msra.mxu0 0
        %1052 = vmatprep.subr.bf16.mxu0 0
        %1053 = vmatpush1.bf16.msra.mxu0 0
        %1054 = vmatprep.subr.bf16.mxu0 0
        %1055 = vmatpush1.bf16.msra.mxu0 0
        %1056 = vmatprep.subr.bf16.mxu0 0
        %1057 = vmatpush1.bf16.msra.mxu0 0
        %1058 = vmatprep.subr.bf16.mxu0 0
        %1059 = vmatpush1.bf16.msra.mxu0 0
        %1060 = vmatprep.subr.bf16.mxu0 0
        %1061 = vmatpush1.bf16.msra.mxu0 0
        %1062 = vmatprep.subr.bf16.mxu0 0
        %1063 = vmatpush1.bf16.msra.mxu0 0
        %1064 = vmatprep.subr.bf16.mxu0 0
        %1065 = vmatpush1.bf16.msra.mxu0 0
        %1066 = vmatprep.subr.bf16.mxu0 0
        %1067 = vmatpush1.bf16.msra.mxu0 0
        %1068 = vmatprep.mubr.bf16.mxu0 0
        %1069 = vmatmul.mubr.bf16.gmra.mrb[0].mxu0 %v1028
        %v1070 = vpop.f32.mrb[0].mxu0
        %v1071 = vadd.f32 0.0, %v1070
        %v1072 = vpop.f32.mrb[0].mxu0
        %v1073 = vadd.f32 0.0, %v1072
        %v1074 = vpop.f32.mrb[0].mxu0
        %v1075 = vpop.f32.mrb[0].mxu0
        %1076 = vdwg.mxu0
        %v1077 = vadd.f32 %v1005, %v1071
        %v1078 = vadd.f32 %v1006, %v1073
        %s1079 = scalar_lea.vmem %s2, 16
        %v1080 = vld [vmem:[%s1079] sm:$0xf]
        %v1081 = vpack.c.bf16 %v810, %v810
        %v1082 = vpack.c.bf16 %v811, %v811
        %v1084 = vsel %vm265, %v1080, 0
        %v1087 = vsel %vm269, %v1081, 0
        %v1090 = vsel %vm269, %v1082, 0
        %1092 = vmatprep.subr.bf16.mxu0 %v1090
        %1093 = vmatpush1.bf16.msra.mxu0 %v1087
        %1094 = vmatprep.subr.bf16.mxu0 0
        %1095 = vmatpush1.bf16.msra.mxu0 0
        %1096 = vmatprep.subr.bf16.mxu0 0
        %1097 = vmatpush1.bf16.msra.mxu0 0
        %1098 = vmatprep.subr.bf16.mxu0 0
        %1099 = vmatpush1.bf16.msra.mxu0 0
        %1100 = vmatprep.subr.bf16.mxu0 0
        %1101 = vmatpush1.bf16.msra.mxu0 0
        %1102 = vmatprep.subr.bf16.mxu0 0
        %1103 = vmatpush1.bf16.msra.mxu0 0
        %1104 = vmatprep.subr.bf16.mxu0 0
        %1105 = vmatpush1.bf16.msra.mxu0 0
        %1106 = vmatprep.subr.bf16.mxu0 0
        %1107 = vmatpush1.bf16.msra.mxu0 0
        %1108 = vmatprep.subr.bf16.mxu0 0
        %1109 = vmatpush1.bf16.msra.mxu0 0
        %1110 = vmatprep.subr.bf16.mxu0 0
        %1111 = vmatpush1.bf16.msra.mxu0 0
        %1112 = vmatprep.subr.bf16.mxu0 0
        %1113 = vmatpush1.bf16.msra.mxu0 0
        %1114 = vmatprep.subr.bf16.mxu0 0
        %1115 = vmatpush1.bf16.msra.mxu0 0
        %1116 = vmatprep.subr.bf16.mxu0 0
        %1117 = vmatpush1.bf16.msra.mxu0 0
        %1118 = vmatprep.subr.bf16.mxu0 0
        %1119 = vmatpush1.bf16.msra.mxu0 0
        %1120 = vmatprep.subr.bf16.mxu0 0
        %1121 = vmatpush1.bf16.msra.mxu0 0
        %1122 = vmatprep.subr.bf16.mxu0 0
        %1123 = vmatpush1.bf16.msra.mxu0 0
        %1124 = vmatprep.mubr.bf16.mxu0 0
        %1125 = vmatmul.mubr.bf16.gmra.mrb[0].mxu0 %v1084
        %v1126 = vpop.f32.mrb[0].mxu0
        %v1127 = vadd.f32 0.0, %v1126
        %v1128 = vpop.f32.mrb[0].mxu0
        %v1129 = vadd.f32 0.0, %v1128
        %v1130 = vpop.f32.mrb[0].mxu0
        %v1131 = vpop.f32.mrb[0].mxu0
        %1132 = vdwg.mxu0
        %v1133 = vadd.f32 %v1077, %v1127
        %v1134 = vadd.f32 %v1078, %v1129
        %s1135 = scalar_lea.vmem %s2, 20
        %v1136 = vld [vmem:[%s1135] sm:$0xf]
        %v1137 = vpack.c.bf16 %v1021, %v1021
        %v1138 = vpack.c.bf16 %v1022, %v1022
        %v1140 = vsel %vm265, %v1136, 0
        %v1143 = vsel %vm269, %v1137, 0
        %v1146 = vsel %vm269, %v1138, 0
        %1148 = vmatprep.subr.bf16.mxu0 %v1146
        %1149 = vmatpush1.bf16.msra.mxu0 %v1143
        %1150 = vmatprep.subr.bf16.mxu0 0
        %1151 = vmatpush1.bf16.msra.mxu0 0
        %1152 = vmatprep.subr.bf16.mxu0 0
        %1153 = vmatpush1.bf16.msra.mxu0 0
        %1154 = vmatprep.subr.bf16.mxu0 0
        %1155 = vmatpush1.bf16.msra.mxu0 0
        %1156 = vmatprep.subr.bf16.mxu0 0
        %1157 = vmatpush1.bf16.msra.mxu0 0
        %1158 = vmatprep.subr.bf16.mxu0 0
        %1159 = vmatpush1.bf16.msra.mxu0 0
        %1160 = vmatprep.subr.bf16.mxu0 0
        %1161 = vmatpush1.bf16.msra.mxu0 0
        %1162 = vmatprep.subr.bf16.mxu0 0
        %1163 = vmatpush1.bf16.msra.mxu0 0
        %1164 = vmatprep.subr.bf16.mxu0 0
        %1165 = vmatpush1.bf16.msra.mxu0 0
        %1166 = vmatprep.subr.bf16.mxu0 0
        %1167 = vmatpush1.bf16.msra.mxu0 0
        %1168 = vmatprep.subr.bf16.mxu0 0
        %1169 = vmatpush1.bf16.msra.mxu0 0
        %1170 = vmatprep.subr.bf16.mxu0 0
        %1171 = vmatpush1.bf16.msra.mxu0 0
        %1172 = vmatprep.subr.bf16.mxu0 0
        %1173 = vmatpush1.bf16.msra.mxu0 0
        %1174 = vmatprep.subr.bf16.mxu0 0
        %1175 = vmatpush1.bf16.msra.mxu0 0
        %1176 = vmatprep.subr.bf16.mxu0 0
        %1177 = vmatpush1.bf16.msra.mxu0 0
        %1178 = vmatprep.subr.bf16.mxu0 0
        %1179 = vmatpush1.bf16.msra.mxu0 0
        %1180 = vmatprep.mubr.bf16.mxu0 0
        %1181 = vmatmul.mubr.bf16.gmra.mrb[0].mxu0 %v1140
        %v1182 = vpop.f32.mrb[0].mxu0
        %v1183 = vadd.f32 0.0, %v1182
        %v1184 = vpop.f32.mrb[0].mxu0
        %v1185 = vadd.f32 0.0, %v1184
        %v1186 = vpop.f32.mrb[0].mxu0
        %v1187 = vpop.f32.mrb[0].mxu0
        %1188 = vdwg.mxu0
        %v1189 = vadd.f32 %v1133, %v1183
        %v1190 = vadd.f32 %v1134, %v1185
        %1191 = vrot.lane.b32.xlu0 %v826, 1
        %v1192 = vpop.permute.xlu0 %1191
        %1193 = vrot.lane.b32.xlu0 %v827, 1
        %v1194 = vpop.permute.xlu0 %1193
        %v1195 = vsel %vm236, %v1192, %v1194
        %v1196 = vsel %vm236, %v1194, %v1192
        %1197 = vrot.lane.b32.xlu0 %v826, 127
        %v1198 = vpop.permute.xlu0 %1197
        %1199 = vrot.lane.b32.xlu0 %v827, 127
        %v1200 = vpop.permute.xlu0 %1199
        %v1201 = vsel %vm243, %v1198, %v1200
        %v1202 = vsel %vm243, %v1200, %v1198
        %v1203 = vsel %vm248, %v1201, %v1196
        %v1204 = vsel %vm249, %v1202, %v1195
        %v1205 = vsel %vm254, %v1196, %v1201
        %v1206 = vsel %vm255, %v1195, %v1202
        %s1207 = scalar_lea.vmem %s2, 24
        %v1208 = vld [vmem:[%s1207] sm:$0xf]
        %v1209 = vpack.c.bf16 %v1203, %v1203
        %v1210 = vpack.c.bf16 %v1204, %v1204
        %v1212 = vsel %vm265, %v1208, 0
        %v1215 = vsel %vm269, %v1209, 0
        %v1218 = vsel %vm269, %v1210, 0
        %1220 = vmatprep.subr.bf16.mxu0 %v1218
        %1221 = vmatpush1.bf16.msra.mxu0 %v1215
        %1222 = vmatprep.subr.bf16.mxu0 0
        %1223 = vmatpush1.bf16.msra.mxu0 0
        %1224 = vmatprep.subr.bf16.mxu0 0
        %1225 = vmatpush1.bf16.msra.mxu0 0
        %1226 = vmatprep.subr.bf16.mxu0 0
        %1227 = vmatpush1.bf16.msra.mxu0 0
        %1228 = vmatprep.subr.bf16.mxu0 0
        %1229 = vmatpush1.bf16.msra.mxu0 0
        %1230 = vmatprep.subr.bf16.mxu0 0
        %1231 = vmatpush1.bf16.msra.mxu0 0
        %1232 = vmatprep.subr.bf16.mxu0 0
        %1233 = vmatpush1.bf16.msra.mxu0 0
        %1234 = vmatprep.subr.bf16.mxu0 0
        %1235 = vmatpush1.bf16.msra.mxu0 0
        %1236 = vmatprep.subr.bf16.mxu0 0
        %1237 = vmatpush1.bf16.msra.mxu0 0
        %1238 = vmatprep.subr.bf16.mxu0 0
        %1239 = vmatpush1.bf16.msra.mxu0 0
        %1240 = vmatprep.subr.bf16.mxu0 0
        %1241 = vmatpush1.bf16.msra.mxu0 0
        %1242 = vmatprep.subr.bf16.mxu0 0
        %1243 = vmatpush1.bf16.msra.mxu0 0
        %1244 = vmatprep.subr.bf16.mxu0 0
        %1245 = vmatpush1.bf16.msra.mxu0 0
        %1246 = vmatprep.subr.bf16.mxu0 0
        %1247 = vmatpush1.bf16.msra.mxu0 0
        %1248 = vmatprep.subr.bf16.mxu0 0
        %1249 = vmatpush1.bf16.msra.mxu0 0
        %1250 = vmatprep.subr.bf16.mxu0 0
        %1251 = vmatpush1.bf16.msra.mxu0 0
        %1252 = vmatprep.mubr.bf16.mxu0 0
        %1253 = vmatmul.mubr.bf16.gmra.mrb[0].mxu0 %v1212
        %v1254 = vpop.f32.mrb[0].mxu0
        %v1255 = vadd.f32 0.0, %v1254
        %v1256 = vpop.f32.mrb[0].mxu0
        %v1257 = vadd.f32 0.0, %v1256
        %v1258 = vpop.f32.mrb[0].mxu0
        %v1259 = vpop.f32.mrb[0].mxu0
        %1260 = vdwg.mxu0
        %v1261 = vadd.f32 %v1189, %v1255
        %v1262 = vadd.f32 %v1190, %v1257
        %s1263 = scalar_lea.vmem %s2, 28
        %v1264 = vld [vmem:[%s1263] sm:$0xf]
        %v1265 = vpack.c.bf16 %v826, %v826
        %v1266 = vpack.c.bf16 %v827, %v827
        %v1268 = vsel %vm265, %v1264, 0
        %v1271 = vsel %vm269, %v1265, 0
        %v1274 = vsel %vm269, %v1266, 0
        %1276 = vmatprep.subr.bf16.mxu0 %v1274
        %1277 = vmatpush1.bf16.msra.mxu0 %v1271
        %1278 = vmatprep.subr.bf16.mxu0 0
        %1279 = vmatpush1.bf16.msra.mxu0 0
        %1280 = vmatprep.subr.bf16.mxu0 0
        %1281 = vmatpush1.bf16.msra.mxu0 0
        %1282 = vmatprep.subr.bf16.mxu0 0
        %1283 = vmatpush1.bf16.msra.mxu0 0
        %1284 = vmatprep.subr.bf16.mxu0 0
        %1285 = vmatpush1.bf16.msra.mxu0 0
        %1286 = vmatprep.subr.bf16.mxu0 0
        %1287 = vmatpush1.bf16.msra.mxu0 0
        %1288 = vmatprep.subr.bf16.mxu0 0
        %1289 = vmatpush1.bf16.msra.mxu0 0
        %1290 = vmatprep.subr.bf16.mxu0 0
        %1291 = vmatpush1.bf16.msra.mxu0 0
        %1292 = vmatprep.subr.bf16.mxu0 0
        %1293 = vmatpush1.bf16.msra.mxu0 0
        %1294 = vmatprep.subr.bf16.mxu0 0
        %1295 = vmatpush1.bf16.msra.mxu0 0
        %1296 = vmatprep.subr.bf16.mxu0 0
        %1297 = vmatpush1.bf16.msra.mxu0 0
        %1298 = vmatprep.subr.bf16.mxu0 0
        %1299 = vmatpush1.bf16.msra.mxu0 0
        %1300 = vmatprep.subr.bf16.mxu0 0
        %1301 = vmatpush1.bf16.msra.mxu0 0
        %1302 = vmatprep.subr.bf16.mxu0 0
        %1303 = vmatpush1.bf16.msra.mxu0 0
        %1304 = vmatprep.subr.bf16.mxu0 0
        %1305 = vmatpush1.bf16.msra.mxu0 0
        %1306 = vmatprep.subr.bf16.mxu0 0
        %1307 = vmatpush1.bf16.msra.mxu0 0
        %1308 = vmatprep.mubr.bf16.mxu0 0
        %1309 = vmatmul.mubr.bf16.gmra.mrb[0].mxu0 %v1268
        %v1310 = vpop.f32.mrb[0].mxu0
        %v1311 = vadd.f32 0.0, %v1310
        %v1312 = vpop.f32.mrb[0].mxu0
        %v1313 = vadd.f32 0.0, %v1312
        %v1314 = vpop.f32.mrb[0].mxu0
        %v1315 = vpop.f32.mrb[0].mxu0
        %1316 = vdwg.mxu0
        %v1317 = vadd.f32 %v1261, %v1311
        %v1318 = vadd.f32 %v1262, %v1313
        %s1319 = scalar_lea.vmem %s2, 32
        %v1320 = vld [vmem:[%s1319] sm:$0xf]
        %v1321 = vpack.c.bf16 %v1205, %v1205
        %v1322 = vpack.c.bf16 %v1206, %v1206
        %v1324 = vsel %vm265, %v1320, 0
        %v1327 = vsel %vm269, %v1321, 0
        %v1330 = vsel %vm269, %v1322, 0
        %1332 = vmatprep.subr.bf16.mxu0 %v1330
        %1333 = vmatpush1.bf16.msra.mxu0 %v1327
        %1334 = vmatprep.subr.bf16.mxu0 0
        %1335 = vmatpush1.bf16.msra.mxu0 0
        %1336 = vmatprep.subr.bf16.mxu0 0
        %1337 = vmatpush1.bf16.msra.mxu0 0
        %1338 = vmatprep.subr.bf16.mxu0 0
        %1339 = vmatpush1.bf16.msra.mxu0 0
        %1340 = vmatprep.subr.bf16.mxu0 0
        %1341 = vmatpush1.bf16.msra.mxu0 0
        %1342 = vmatprep.subr.bf16.mxu0 0
        %1343 = vmatpush1.bf16.msra.mxu0 0
        %1344 = vmatprep.subr.bf16.mxu0 0
        %1345 = vmatpush1.bf16.msra.mxu0 0
        %1346 = vmatprep.subr.bf16.mxu0 0
        %1347 = vmatpush1.bf16.msra.mxu0 0
        %1348 = vmatprep.subr.bf16.mxu0 0
        %1349 = vmatpush1.bf16.msra.mxu0 0
        %1350 = vmatprep.subr.bf16.mxu0 0
        %1351 = vmatpush1.bf16.msra.mxu0 0
        %1352 = vmatprep.subr.bf16.mxu0 0
        %1353 = vmatpush1.bf16.msra.mxu0 0
        %1354 = vmatprep.subr.bf16.mxu0 0
        %1355 = vmatpush1.bf16.msra.mxu0 0
        %1356 = vmatprep.subr.bf16.mxu0 0
        %1357 = vmatpush1.bf16.msra.mxu0 0
        %1358 = vmatprep.subr.bf16.mxu0 0
        %1359 = vmatpush1.bf16.msra.mxu0 0
        %1360 = vmatprep.subr.bf16.mxu0 0
        %1361 = vmatpush1.bf16.msra.mxu0 0
        %1362 = vmatprep.subr.bf16.mxu0 0
        %1363 = vmatpush1.bf16.msra.mxu0 0
        %1364 = vmatprep.mubr.bf16.mxu0 0
        %1365 = vmatmul.mubr.bf16.gmra.mrb[0].mxu0 %v1324
        %v1366 = vpop.f32.mrb[0].mxu0
        %v1367 = vadd.f32 0.0, %v1366
        %v1368 = vpop.f32.mrb[0].mxu0
        %v1369 = vadd.f32 0.0, %v1368
        %v1370 = vpop.f32.mrb[0].mxu0
        %v1371 = vpop.f32.mrb[0].mxu0
        %1372 = vdwg.mxu0
        %v1373 = vadd.f32 %v1317, %v1367
        %v1374 = vadd.f32 %v1318, %v1369
        %v1375 = vadd.f32 %v1373, %v1374
        %1376 = vadd.xlane.f32.xlu0 %v1375
        %v1377 = vpop.xlane.xlu0 %1376
        %v1378 = vmul.f32 %v1373, %v1373
        %v1379 = vmul.f32 %v1374, %v1374
        %v1380 = vadd.f32 %v1378, %v1379
        %1381 = vadd.xlane.f32.xlu0 %v1380
        %v1382 = vpop.xlane.xlu0 %1381
        %v1383 = vmul.f32 %v1377, 0.00390625
        %v1384 = vmul.f32 %v1382, 0.00390625
        %v1385 = vmul.f32 %v1383, %v1383
        %v1386 = vsub.f32 %v1384, %v1385
        %v1387 = vmax.f32 %v1386, 0.0
        %v1388 = vsub.f32 %v1373, %v1383
        %v1389 = vsub.f32 %v1374, %v1383
        %v1390 = vadd.f32 %v1387, 1e-05
        %v1391 = vrsqrt.pop %v1390
        %v1392 = vmul.f32 %v1388, %v1391
        %v1393 = vmul.f32 %v1389, %v1391
        %v1394 = vadd.f32 %v170, %v1392
        %v1395 = vadd.f32 %v171, %v1393
        %1396 = vst [vmem:[%s163] sm:$0xff] %v1394
        %1397 = vst [vmem:[%s163 + $0x8] sm:$0xff] %v1395
        %s1398 = sand.u32 %s93, 1
        %s1399 = scalar_lea.sflag [#allocation3], %s1398
        %s1400 = sand.u32 %s93, 1
        %s1401 = smul.addr %s1400, 16
        %s1402 = scalar_lea.vmem [#allocation2], %s1401
        // Predicated region
        $region33: #{tpu_custom_call.1} parent=31 // pred_check
          %p1403 = pneg %p103
        $region34: #{tpu_custom_call.1} parent=31 // pred_check_branch
          %1405 = sbr.rel (%p1403) target = $region36
        $region35: #{tpu_custom_call.1} parent=31 // pred_region
          %s1407 = ssub.s32 256, 256
          %1408 = vsyncadd %s1399, %s1407
          %s1409 = smul.addr %s17, 2
          %s1410 = smul.addr %s1409, 128
          %s1411 = scalar_lea.hbm %s3, %s1410
          %s1413 = sshll.u32 %s1402, 4
          %s1414 = int_to_ptr.vmem [resolvable:$true] %s1413
          %1416 = dma.vmem_to_hbm [thread:$0]  %s1414, 256, %s1411, %s1399
        $region36: #{tpu_custom_call.1} parent=31 // pred_fallthru
          _
      $region32: #{tpu_custom_call.1} parent=5 // pred_fallthru
        _
      %p1417 = scmp.le.s32.totalorder 2, %s12
      // Predicated region
      $region37: #{tpu_custom_call.1} parent=5 // pred_check
        %p1418 = pneg %p1417
      $region38: #{tpu_custom_call.1} parent=5 // pred_check_branch
        %1420 = sbr.rel (%p1418) target = $region40
      $region39: #{tpu_custom_call.1} parent=5 // pred_region
        %s1421 = ssub.s32 %s12, 2
        // Predicated region
        $region41: #{tpu_custom_call.1} parent=39 // pred_check
          %p1422 = pneg %p109
        $region42: #{tpu_custom_call.1} parent=39 // pred_check_branch
          %1424 = sbr.rel (%p1422) target = $region44
        $region43: #{tpu_custom_call.1} parent=39 // pred_region
          %s1425 = sand.u32 %s94, 1
          %s1426 = scalar_lea.sflag [#allocation3], %s1425
          %s1427 = sand.u32 %s94, 1
          %s1428 = smul.addr %s1427, 16
          %s1429 = scalar_lea.vmem [#allocation2], %s1428
          %1430 = dma.done %s1426, 256
        $region44: #{tpu_custom_call.1} parent=39 // pred_fallthru
          _
      $region40: #{tpu_custom_call.1} parent=5 // pred_fallthru
        _
    $region6: #{tpu_custom_call.1} parent=1 // loop_footer
      %s16 = sadd.s32 1, %s12
    $region7: #{tpu_custom_call.1} parent=1 // loop_footer_branch
      %11 = sbr.rel target = $region3
    $region8: #{tpu_custom_call.1} parent=1 // loop_exit
      _
    %1431 = vsyncpa [#allocation3], 1
    %s1432 = scalar_lea.sflag [#allocation3], 1
    %1433 = vsyncpa %s1432, 1

</llo_original>
